<compile_context>
chip_gen: v7x
topology: tpu7x:2x2x1
jax: 0.10.0
libtpu: 0.0.40
codegen_flags: <defaults>
</compile_context>

<pallas_src>
import functools

import jax
import jax.numpy as jnp
from jax.experimental import pallas as pl
from jax.experimental.pallas import tpu as pltpu


def _spatial_linear_attn_kernel(x_ref, wqkv_ref, wout_ref, bout_ref, mask_ref,
                                o_ref, *, heads, dim_head, tb, n, mxu_dtype):
    """One grid step = one (batch, frame-group) block, channel-major (C, tb, N)."""
    f32 = jnp.float32
    hd = heads * dim_head

    wqkv = wqkv_ref[...]              # (3*HD, C)   mxu_dtype
    wout = wout_ref[...]              # (C, HD)     mxu_dtype (q scale folded in)
    bout = bout_ref[...]              # (C, 1)      f32
    mask = mask_ref[...]              # (HD, HD)    f32 block-diagonal head mask

    for t in range(tb):               # tb is small & static -> fully unrolled
        xt = x_ref[0, :, t, :]        # (C, N) channel-major, mxu_dtype

        # ---- to_qkv (1x1 conv == matmul), f32 accumulation ------------------
        qkv = jnp.dot(wqkv, xt, preferred_element_type=f32)      # (3*HD, N)
        q = qkv[0 * hd:1 * hd, :]                                # (HD, N)
        k = qkv[1 * hd:2 * hd, :]
        v = qkv[2 * hd:3 * hd, :]

        # ---- q softmax over the per-head feature axis d (sublane groups) ----
        q3 = q.reshape(heads, dim_head, n)                       # free split
        q_max = jnp.max(q3, axis=1, keepdims=True)               # (H, 1, N)
        q_exp = jnp.exp(q3 - q_max)
        q_den = jnp.sum(q_exp, axis=1, keepdims=True)            # (H, 1, N)
        q_soft = (q_exp * pl.reciprocal(q_den, approx=True)).reshape(hd, n)
        # (post-softmax `scale` is folded into W_out in the wrapper)

        # ---- k softmax over the spatial axis n (lanes), per frame -----------
        k_max = jnp.max(k, axis=1, keepdims=True)                # (HD, 1)
        k_exp = jnp.exp(k - k_max)
        k_den = jnp.sum(k_exp, axis=1, keepdims=True)
        k_soft = k_exp * pl.reciprocal(k_den, approx=True)       # (HD, N)

        # ---- linear attention, heads folded into full-width MXU passes ------
        # ctxT[e, d] = sum_n v[e, n] * k_soft[d, n]   (rhs-transposed matmul)
        ctx_t = jax.lax.dot_general(
            v.astype(mxu_dtype), k_soft.astype(mxu_dtype),
            (((1,), (1,)), ((), ())), preferred_element_type=f32)  # (HD, HD)
        ctx_t = ctx_t * mask                                      # keep head blocks
        # out[e, n] = sum_d ctxT[e, d] * q_soft[d, n]
        out = jnp.dot(ctx_t.astype(mxu_dtype), q_soft.astype(mxu_dtype),
                      preferred_element_type=f32)                 # (HD, N)

        # ---- to_out (1x1 conv + bias), channel-major store -------------------
        o = jnp.dot(wout, out.astype(mxu_dtype), preferred_element_type=f32)
        o_ref[0, :, t, :] = (o + bout).astype(o_ref.dtype)        # (C, N)


def _pick_frames_per_block(f, n, c, itemsize):
    """Frames per grid step.  The block's second-to-last dim (tb) must be a
    multiple of 8 or the full F extent; prefer the smallest block with >=128
    tokens of work so the grid stays long (pipelining / megacore)."""
    cands = [t for t in range(1, f + 1)
             if f % t == 0 and (t == f or t % 8 == 0)]
    budget = 8 * 1024 * 1024                      # per input block (2x buffered)
    fits = [t for t in cands if c * t * n * itemsize <= budget] or [min(cands)]
    dense = [t for t in fits if t * n >= 128]
    return min(dense) if dense else max(fits)


def spatial_linear_attention(x, w_qkv, w_out, b_out, *, heads, dim_head):
    """x: (B, C, F, H, W) float32.  Returns (B, C, F, H, W) float32."""
    b, c, f, h, w = x.shape
    n = h * w
    hidden = heads * dim_head
    scale = dim_head ** -0.5

    # bf16 MXU operands only on real TPU; f32 everywhere else (CPU / interpret
    # executors do not support bf16 x bf16 -> f32 dots).
    on_tpu = jax.default_backend() == "tpu"
    mxu_dtype = jnp.bfloat16 if on_tpu else jnp.float32

    tb = _pick_frames_per_block(f, n, c, jnp.dtype(mxu_dtype).itemsize)
    fg = f // tb

    # Free reshape only -- no HBM transpose/repack; the BlockSpec index_map
    # selects the (batch, frame-group) slice directly.
    x_r = x.reshape(b, c, f, n).astype(mxu_dtype)

    w_qkv_m = w_qkv.astype(mxu_dtype)                         # (3*hidden, C)
    # Fold the post-softmax q scale into the output projection (exact: the
    # attention output is linear in q).  The bias stays un-scaled.
    w_out_m = (w_out * scale).astype(mxu_dtype)               # (C, hidden)
    b_out2d = b_out.reshape(c, 1).astype(jnp.float32)

    # Block-diagonal head mask (constant index_map -> DMA'd once, VMEM-resident).
    ri = jnp.arange(hidden)[:, None] // dim_head
    ci = jnp.arange(hidden)[None, :] // dim_head
    head_mask = (ri == ci).astype(jnp.float32)                # (HD, HD)

    kernel = functools.partial(_spatial_linear_attn_kernel, heads=heads,
                               dim_head=dim_head, tb=tb, n=n,
                               mxu_dtype=mxu_dtype)

    out = pl.pallas_call(
        kernel,
        out_shape=jax.ShapeDtypeStruct((b, c, f, n), jnp.float32),
        grid_spec=pltpu.PrefetchScalarGridSpec(
            num_scalar_prefetch=0,
            grid=(b, fg),
            in_specs=[
                pl.BlockSpec((1, c, tb, n), lambda bi, fi: (bi, 0, fi, 0)),   # x
                pl.BlockSpec((3 * hidden, c), lambda bi, fi: (0, 0)),         # W_qkv
                pl.BlockSpec((c, hidden), lambda bi, fi: (0, 0)),             # W_out*scale
                pl.BlockSpec((c, 1), lambda bi, fi: (0, 0)),                  # b_out
                pl.BlockSpec((hidden, hidden), lambda bi, fi: (0, 0)),        # head mask
            ],
            out_specs=pl.BlockSpec((1, c, tb, n), lambda bi, fi: (bi, 0, fi, 0)),
        ),
        compiler_params=pltpu.CompilerParams(
            dimension_semantics=("parallel", "parallel"),
            vmem_limit_bytes=32 * 1024 * 1024),
    )(x_r, w_qkv_m, w_out_m, b_out2d, head_mask)

    return out.reshape(b, c, f, h, w)                          # free reshape


def _reference(x, w_qkv, w_out, b_out, *, heads, dim_head):
    """Pure-JAX f32 reference matching the PyTorch module semantics."""
    b, c, f, h, w = x.shape
    n = h * w
    scale = dim_head ** -0.5
    xr = jnp.transpose(x, (0, 2, 1, 3, 4)).reshape(b * f, c, n)
    qkv = jnp.einsum('oc,bcn->bon', w_qkv, xr).reshape(b * f, 3, heads, dim_head, n)
    q, k, v = qkv[:, 0], qkv[:, 1], qkv[:, 2]
    q = jax.nn.softmax(q, axis=2) * scale
    k = jax.nn.softmax(k, axis=3)
    context = jnp.einsum('bhdn,bhen->bhde', k, v)
    out = jnp.einsum('bhde,bhdn->bhen', context, q).reshape(b * f, heads * dim_head, n)
    o = jnp.einsum('oc,bcn->bon', w_out, out) + b_out[None, :, None]
    return jnp.transpose(o.reshape(b, f, c, h, w), (0, 2, 1, 3, 4))


if __name__ == "__main__":
    # Module hyperparameters (defaults from __init__)
    dim = 4
    heads = 4
    dim_head = 32
    hidden = heads * dim_head

    # Small 5D input: (B, C, F, H, W); N = H*W = 64.
    B, F_, H, W = 2, 2, 8, 8
    key = jax.random.PRNGKey(0)
    kx, kq, kw, kb = jax.random.split(key, 4)

    x = jax.random.normal(kx, (B, dim, F_, H, W), dtype=jnp.float32)
    # to_qkv: Conv2d(dim, hidden*3, 1, bias=False) -> weight (3*hidden, dim)
    w_qkv = 0.1 * jax.random.normal(kq, (3 * hidden, dim), dtype=jnp.float32)
    # to_out: Conv2d(hidden, dim, 1) -> weight (dim, hidden), bias (dim,)
    w_out = 0.1 * jax.random.normal(kw, (dim, hidden), dtype=jnp.float32)
    b_out = 0.1 * jax.random.normal(kb, (dim,), dtype=jnp.float32)

    out = spatial_linear_attention(x, w_qkv, w_out, b_out,
                                   heads=heads, dim_head=dim_head)
    out = jax.block_until_ready(out)

    ref = _reference(x, w_qkv, w_out, b_out, heads=heads, dim_head=dim_head)
    assert out.shape == (B, dim, F_, H, W)
    # bf16 MXU operands + approx reciprocal (TPU path) => bf16-level tolerance
    # against the exact f32 reference; the f32 fallback path passes trivially.
    assert jnp.allclose(out, ref, atol=2e-2, rtol=2e-2), \
        float(jnp.max(jnp.abs(out - ref)))
    print("KERNEL_OK")
</pallas_src>

<mosaic_0001>
module attributes {stable_mosaic.version = 11 : i64} {
  func.func @_spatial_linear_attn_kernel(%arg0: i32, %arg1: i32, %arg2: memref<1x4x2x64xf32, #tpu.memory_space<vmem>>, %arg3: memref<384x4xf32, #tpu.memory_space<vmem>>, %arg4: memref<4x128xf32, #tpu.memory_space<vmem>>, %arg5: memref<4x1xf32, #tpu.memory_space<vmem>>, %arg6: memref<128x128xf32, #tpu.memory_space<vmem>>, %arg7: memref<1x4x2x64xf32, #tpu.memory_space<vmem>>) attributes {dimension_semantics = [#tpu.dimension_semantics<parallel>, #tpu.dimension_semantics<parallel>], iteration_bounds = array<i64: 2, 1>, scalar_prefetch = 0 : i64, scratch_operands = 0 : i64, tpu.core_type = #tpu.core_type<tc>, window_params = [{transform_indices = @transform_0, window_bounds = array<i64: 1, 4, 2, 64>}, {pipeline_mode = #tpu.pipeline_mode<synchronous>, transform_indices = @transform_1, window_bounds = array<i64: 384, 4>}, {pipeline_mode = #tpu.pipeline_mode<synchronous>, transform_indices = @transform_2, window_bounds = array<i64: 4, 128>}, {pipeline_mode = #tpu.pipeline_mode<synchronous>, transform_indices = @transform_3, window_bounds = array<i64: 4, 1>}, {pipeline_mode = #tpu.pipeline_mode<synchronous>, transform_indices = @transform_4, window_bounds = array<i64: 128, 128>}, {transform_indices = @transform_5, window_bounds = array<i64: 1, 4, 2, 64>}]} {
    %c0 = arith.constant 0 : index
    %c0_0 = arith.constant 0 : index
    %0 = vector.load %arg3[%c0, %c0_0] : memref<384x4xf32, #tpu.memory_space<vmem>>, vector<384x4xf32>
    %c0_1 = arith.constant 0 : index
    %c0_2 = arith.constant 0 : index
    %1 = vector.load %arg4[%c0_1, %c0_2] : memref<4x128xf32, #tpu.memory_space<vmem>>, vector<4x128xf32>
    %c0_3 = arith.constant 0 : index
    %c0_4 = arith.constant 0 : index
    %2 = vector.load %arg5[%c0_3, %c0_4] : memref<4x1xf32, #tpu.memory_space<vmem>>, vector<4x1xf32>
    %c0_5 = arith.constant 0 : index
    %c0_6 = arith.constant 0 : index
    %3 = vector.load %arg6[%c0_5, %c0_6] : memref<128x128xf32, #tpu.memory_space<vmem>>, vector<128x128xf32>
    %c0_7 = arith.constant 0 : index
    %c0_8 = arith.constant 0 : index
    %c0_9 = arith.constant 0 : index
    %c0_10 = arith.constant 0 : index
    %4 = vector.load %arg2[%c0_7, %c0_8, %c0_9, %c0_10] : memref<1x4x2x64xf32, #tpu.memory_space<vmem>>, vector<1x4x1x64xf32>
    %5 = vector.shape_cast %4 : vector<1x4x1x64xf32> to vector<4x64xf32>
    %cst = arith.constant dense<0.000000e+00> : vector<384x64xf32>
    %6 = tpu.matmul %0, %5, %cst {dimension_numbers = #tpu.dot_dimension_numbers<[1], [0], [0], [1], [0, 0, 1, 1], [], []>} : vector<384x4xf32>, vector<4x64xf32>, vector<384x64xf32> -> vector<384x64xf32>
    %7 = vector.extract_strided_slice %6 {offsets = [0, 0], sizes = [128, 64], strides = [1, 1]} : vector<384x64xf32> to vector<128x64xf32>
    %8 = vector.extract_strided_slice %6 {offsets = [128, 0], sizes = [128, 64], strides = [1, 1]} : vector<384x64xf32> to vector<128x64xf32>
    %9 = vector.extract_strided_slice %6 {offsets = [256, 0], sizes = [128, 64], strides = [1, 1]} : vector<384x64xf32> to vector<128x64xf32>
    %10 = vector.shape_cast %7 : vector<128x64xf32> to vector<4x32x64xf32>
    %cst_11 = arith.constant dense<0xFF800000> : vector<4x64xf32>
    %11 = vector.multi_reduction <maximumf>, %10, %cst_11 [1] : vector<4x32x64xf32> to vector<4x64xf32>
    %12 = vector.shape_cast %11 : vector<4x64xf32> to vector<4x1x64xf32>
    %13 = vector.broadcast %12 : vector<4x1x64xf32> to vector<4x32x64xf32>
    %14 = arith.subf %10, %13 : vector<4x32x64xf32>
    %15 = math.exp %14 : vector<4x32x64xf32>
    %cst_12 = arith.constant dense<0.000000e+00> : vector<4x64xf32>
    %16 = vector.multi_reduction <add>, %15, %cst_12 [1] : vector<4x32x64xf32> to vector<4x64xf32>
    %17 = vector.shape_cast %16 : vector<4x64xf32> to vector<4x1x64xf32>
    %18 = tpu.reciprocal %17 {approx = true} : vector<4x1x64xf32> -> vector<4x1x64xf32>
    %19 = vector.broadcast %18 : vector<4x1x64xf32> to vector<4x32x64xf32>
    %20 = arith.mulf %15, %19 : vector<4x32x64xf32>
    %21 = vector.shape_cast %20 : vector<4x32x64xf32> to vector<128x64xf32>
    %cst_13 = arith.constant dense<0xFF800000> : vector<128xf32>
    %22 = vector.multi_reduction <maximumf>, %8, %cst_13 [1] : vector<128x64xf32> to vector<128xf32>
    %23 = vector.shape_cast %22 : vector<128xf32> to vector<128x1xf32>
    %24 = vector.broadcast %23 : vector<128x1xf32> to vector<128x64xf32>
    %25 = arith.subf %8, %24 : vector<128x64xf32>
    %26 = math.exp %25 : vector<128x64xf32>
    %cst_14 = arith.constant dense<0.000000e+00> : vector<128xf32>
    %27 = vector.multi_reduction <add>, %26, %cst_14 [1] : vector<128x64xf32> to vector<128xf32>
    %28 = vector.shape_cast %27 : vector<128xf32> to vector<128x1xf32>
    %29 = tpu.reciprocal %28 {approx = true} : vector<128x1xf32> -> vector<128x1xf32>
    %30 = vector.broadcast %29 : vector<128x1xf32> to vector<128x64xf32>
    %31 = arith.mulf %26, %30 : vector<128x64xf32>
    %cst_15 = arith.constant dense<0.000000e+00> : vector<128x128xf32>
    %32 = tpu.matmul %9, %31, %cst_15 {dimension_numbers = #tpu.dot_dimension_numbers<[1], [1], [0], [0], [0, 0, 1, 0], [], []>} : vector<128x64xf32>, vector<128x64xf32>, vector<128x128xf32> -> vector<128x128xf32>
    %33 = arith.mulf %32, %3 : vector<128x128xf32>
    %cst_16 = arith.constant dense<0.000000e+00> : vector<128x64xf32>
    %34 = tpu.matmul %33, %21, %cst_16 {dimension_numbers = #tpu.dot_dimension_numbers<[1], [0], [0], [1], [0, 0, 1, 1], [], []>} : vector<128x128xf32>, vector<128x64xf32>, vector<128x64xf32> -> vector<128x64xf32>
    %cst_17 = arith.constant dense<0.000000e+00> : vector<4x64xf32>
    %35 = tpu.matmul %1, %34, %cst_17 {dimension_numbers = #tpu.dot_dimension_numbers<[1], [0], [0], [1], [0, 0, 1, 1], [], []>} : vector<4x128xf32>, vector<128x64xf32>, vector<4x64xf32> -> vector<4x64xf32>
    %36 = vector.broadcast %2 : vector<4x1xf32> to vector<4x64xf32>
    %37 = arith.addf %35, %36 : vector<4x64xf32>
    %c0_18 = arith.constant 0 : index
    %c0_19 = arith.constant 0 : index
    %c0_20 = arith.constant 0 : index
    %c0_21 = arith.constant 0 : index
    %38 = vector.load %arg7[%c0_18, %c0_19, %c0_20, %c0_21] : memref<1x4x2x64xf32, #tpu.memory_space<vmem>>, vector<1x4x1x64xf32>
    %39 = vector.shape_cast %38 : vector<1x4x1x64xf32> to vector<4x64xf32>
    %40 = vector.shape_cast %37 : vector<4x64xf32> to vector<1x4x1x64xf32>
    tpu.vector_store %arg7[%c0_18, %c0_19, %c0_20, %c0_21], %40 {strides = array<i32>} : memref<1x4x2x64xf32, #tpu.memory_space<vmem>>, vector<1x4x1x64xf32>,
    %c0_22 = arith.constant 0 : index
    %c0_23 = arith.constant 0 : index
    %c1 = arith.constant 1 : index
    %c0_24 = arith.constant 0 : index
    %41 = vector.load %arg2[%c0_22, %c0_23, %c1, %c0_24] : memref<1x4x2x64xf32, #tpu.memory_space<vmem>>, vector<1x4x1x64xf32>
    %42 = vector.shape_cast %41 : vector<1x4x1x64xf32> to vector<4x64xf32>
    %cst_25 = arith.constant dense<0.000000e+00> : vector<384x64xf32>
    %43 = tpu.matmul %0, %42, %cst_25 {dimension_numbers = #tpu.dot_dimension_numbers<[1], [0], [0], [1], [0, 0, 1, 1], [], []>} : vector<384x4xf32>, vector<4x64xf32>, vector<384x64xf32> -> vector<384x64xf32>
    %44 = vector.extract_strided_slice %43 {offsets = [0, 0], sizes = [128, 64], strides = [1, 1]} : vector<384x64xf32> to vector<128x64xf32>
    %45 = vector.extract_strided_slice %43 {offsets = [128, 0], sizes = [128, 64], strides = [1, 1]} : vector<384x64xf32> to vector<128x64xf32>
    %46 = vector.extract_strided_slice %43 {offsets = [256, 0], sizes = [128, 64], strides = [1, 1]} : vector<384x64xf32> to vector<128x64xf32>
    %47 = vector.shape_cast %44 : vector<128x64xf32> to vector<4x32x64xf32>
    %cst_26 = arith.constant dense<0xFF800000> : vector<4x64xf32>
    %48 = vector.multi_reduction <maximumf>, %47, %cst_26 [1] : vector<4x32x64xf32> to vector<4x64xf32>
    %49 = vector.shape_cast %48 : vector<4x64xf32> to vector<4x1x64xf32>
    %50 = vector.broadcast %49 : vector<4x1x64xf32> to vector<4x32x64xf32>
    %51 = arith.subf %47, %50 : vector<4x32x64xf32>
    %52 = math.exp %51 : vector<4x32x64xf32>
    %cst_27 = arith.constant dense<0.000000e+00> : vector<4x64xf32>
    %53 = vector.multi_reduction <add>, %52, %cst_27 [1] : vector<4x32x64xf32> to vector<4x64xf32>
    %54 = vector.shape_cast %53 : vector<4x64xf32> to vector<4x1x64xf32>
    %55 = tpu.reciprocal %54 {approx = true} : vector<4x1x64xf32> -> vector<4x1x64xf32>
    %56 = vector.broadcast %55 : vector<4x1x64xf32> to vector<4x32x64xf32>
    %57 = arith.mulf %52, %56 : vector<4x32x64xf32>
    %58 = vector.shape_cast %57 : vector<4x32x64xf32> to vector<128x64xf32>
    %cst_28 = arith.constant dense<0xFF800000> : vector<128xf32>
    %59 = vector.multi_reduction <maximumf>, %45, %cst_28 [1] : vector<128x64xf32> to vector<128xf32>
    %60 = vector.shape_cast %59 : vector<128xf32> to vector<128x1xf32>
    %61 = vector.broadcast %60 : vector<128x1xf32> to vector<128x64xf32>
    %62 = arith.subf %45, %61 : vector<128x64xf32>
    %63 = math.exp %62 : vector<128x64xf32>
    %cst_29 = arith.constant dense<0.000000e+00> : vector<128xf32>
    %64 = vector.multi_reduction <add>, %63, %cst_29 [1] : vector<128x64xf32> to vector<128xf32>
    %65 = vector.shape_cast %64 : vector<128xf32> to vector<128x1xf32>
    %66 = tpu.reciprocal %65 {approx = true} : vector<128x1xf32> -> vector<128x1xf32>
    %67 = vector.broadcast %66 : vector<128x1xf32> to vector<128x64xf32>
    %68 = arith.mulf %63, %67 : vector<128x64xf32>
    %cst_30 = arith.constant dense<0.000000e+00> : vector<128x128xf32>
    %69 = tpu.matmul %46, %68, %cst_30 {dimension_numbers = #tpu.dot_dimension_numbers<[1], [1], [0], [0], [0, 0, 1, 0], [], []>} : vector<128x64xf32>, vector<128x64xf32>, vector<128x128xf32> -> vector<128x128xf32>
    %70 = arith.mulf %69, %3 : vector<128x128xf32>
    %cst_31 = arith.constant dense<0.000000e+00> : vector<128x64xf32>
    %71 = tpu.matmul %70, %58, %cst_31 {dimension_numbers = #tpu.dot_dimension_numbers<[1], [0], [0], [1], [0, 0, 1, 1], [], []>} : vector<128x128xf32>, vector<128x64xf32>, vector<128x64xf32> -> vector<128x64xf32>
    %cst_32 = arith.constant dense<0.000000e+00> : vector<4x64xf32>
    %72 = tpu.matmul %1, %71, %cst_32 {dimension_numbers = #tpu.dot_dimension_numbers<[1], [0], [0], [1], [0, 0, 1, 1], [], []>} : vector<4x128xf32>, vector<128x64xf32>, vector<4x64xf32> -> vector<4x64xf32>
    %73 = vector.broadcast %2 : vector<4x1xf32> to vector<4x64xf32>
    %74 = arith.addf %72, %73 : vector<4x64xf32>
    %c0_33 = arith.constant 0 : index
    %c0_34 = arith.constant 0 : index
    %c1_35 = arith.constant 1 : index
    %c0_36 = arith.constant 0 : index
    %75 = vector.load %arg7[%c0_33, %c0_34, %c1_35, %c0_36] : memref<1x4x2x64xf32, #tpu.memory_space<vmem>>, vector<1x4x1x64xf32>
    %76 = vector.shape_cast %75 : vector<1x4x1x64xf32> to vector<4x64xf32>
    %77 = vector.shape_cast %74 : vector<4x64xf32> to vector<1x4x1x64xf32>
    tpu.vector_store %arg7[%c0_33, %c0_34, %c1_35, %c0_36], %77 {strides = array<i32>} : memref<1x4x2x64xf32, #tpu.memory_space<vmem>>, vector<1x4x1x64xf32>,
    return
  }
  func.func @transform_0(%arg0: i32, %arg1: i32) -> (i32, i32, i32, i32) {
    %c0_i32 = arith.constant 0 : i32
    %c0_i32_0 = arith.constant 0 : i32
    %c0_i32_1 = arith.constant 0 : i32
    return %arg0, %c0_i32, %arg1, %c0_i32_0 : i32, i32, i32, i32
  }
  func.func @transform_1(%arg0: i32, %arg1: i32) -> (i32, i32) {
    %c0_i32 = arith.constant 0 : i32
    %c0_i32_0 = arith.constant 0 : i32
    %c0_i32_1 = arith.constant 0 : i32
    return %c0_i32, %c0_i32_0 : i32, i32
  }
  func.func @transform_2(%arg0: i32, %arg1: i32) -> (i32, i32) {
    %c0_i32 = arith.constant 0 : i32
    %c0_i32_0 = arith.constant 0 : i32
    %c0_i32_1 = arith.constant 0 : i32
    return %c0_i32, %c0_i32_0 : i32, i32
  }
  func.func @transform_3(%arg0: i32, %arg1: i32) -> (i32, i32) {
    %c0_i32 = arith.constant 0 : i32
    %c0_i32_0 = arith.constant 0 : i32
    %c0_i32_1 = arith.constant 0 : i32
    return %c0_i32, %c0_i32_0 : i32, i32
  }
  func.func @transform_4(%arg0: i32, %arg1: i32) -> (i32, i32) {
    %c0_i32 = arith.constant 0 : i32
    %c0_i32_0 = arith.constant 0 : i32
    %c0_i32_1 = arith.constant 0 : i32
    return %c0_i32, %c0_i32_0 : i32, i32
  }
  func.func @transform_5(%arg0: i32, %arg1: i32) -> (i32, i32, i32, i32) {
    %c0_i32 = arith.constant 0 : i32
    %c0_i32_0 = arith.constant 0 : i32
    %c0_i32_1 = arith.constant 0 : i32
    return %arg0, %c0_i32, %arg1, %c0_i32_0 : i32, i32, i32, i32
  }
}

</mosaic_0001>

<llo_original>
// kernel: tpu_custom_call.1
$region0: #{tpu_custom_call.1}
  #allocation0 [shape = 'u32[]', space=smem, size = 0x4, offset = 0x4, fixed_abs, tag = 'smem constant byte address 0x4 - core index']
  #allocation1 [shape = 'u32[144,128]{1,0:T(1,128)}', space=vmem, size = 0x12000, scoped, tag = 'internal scratch']
  %s0 = inlined_call_operand.vmem [shape: f32[2,4,2,64], index: 0, kind: input, shape index: {}]
  %s1 = inlined_call_operand.vmem [shape: f32[384,4], index: 1, kind: input, shape index: {}]
  %s2 = inlined_call_operand.vmem [shape: f32[4,128], index: 2, kind: input, shape index: {}]
  %s3 = inlined_call_operand.vmem [shape: f32[4,1], index: 3, kind: input, shape index: {}]
  %s4 = inlined_call_operand.vmem [shape: f32[128,128], index: 4, kind: input, shape index: {}]
  %s5 = inlined_call_operand.hbm [shape: f32[2,4,2,64], index: 5, kind: output, shape index: {}]
  %s6 = sld [smem:[#allocation0]]
  $region53: #{tpu_custom_call.1} parent=0
    _
  %s8 = ssub.s32 1, %s6
  %s9 = scalar_select 0, %s8, %s6
  $region1: #{tpu_custom_call.1} parent=0
    #allocation2 [shape = 'u8[8192]{0}', space=vmem, size = 0x2000, scoped, tag = 'output window, operand 0']
    #allocation3 [shape = 's32[2]{0}', space=sflag, size = 0x8, scoped, tag = 'scoped memory for tpu_custom_call.1']
    %10 = vsyncpa [#allocation3], 0
    %s11 = scalar_lea.sflag [#allocation3], 1
    %12 = vsyncpa %s11, 0
    loop: start=0, step=1, limit=4
    $region2: #{tpu_custom_call.1} parent=1 // loop_pre_header
      _
    $region3: #{tpu_custom_call.1} parent=1 // loop_header
      %s14 = sphi 0, %s18
      %p15 = scmp.ge.s32.totalorder %s14, 4
      %s21 = sphi 0, %s33
      %s22 = sphi 0, %s29
      %s23 = sphi 0, %s21
      %s24 = sphi 0, %s22
      %s25 = sphi 0, %s23
      %s26 = sphi 0, %s24
      %s38 = sphi 0, %s40
      %s41 = sphi 0, %s38
      %s42 = sphi 0, %s41
      %s58 = sphi 0, %s42
      %s62 = sphi 0, %s62
      %s64 = sphi 0, %s62
      %s65 = sphi 0, %s64
      %s79 = sphi 0, %s65
      %s83 = sphi 0, %s83
      %s85 = sphi 0, %s83
      %s86 = sphi 0, %s85
      %s100 = sphi 0, %s86
      %s104 = sphi 0, %s104
      %s106 = sphi 0, %s104
      %s107 = sphi 0, %s106
      %s121 = sphi 0, %s107
      %s125 = sphi 0, %s125
      %s127 = sphi 0, %s125
      %s128 = sphi 0, %s127
      %s142 = sphi 0, %s128
      %s150 = sphi 0, %s152
      %s153 = sphi 0, %s150
      %s154 = sphi 0, %s153
      %s170 = sphi 0, %s154
    $region4: #{tpu_custom_call.1} parent=1 // loop_header_branch
      %17 = sbr.rel (%p15) target = $region8
    $region5: #{tpu_custom_call.1} parent=1 // loop_body
      %s19 = ssub.s32 %s14, 1
      %s20 = ssub.s32 %s14, 2
      %s27 = sadd.s32 1, %s22
      %p28 = scmp.ge.s32.totalorder %s27, 1
      %s29 = scalar_select %p28, 0, %s27
      %s30 = sadd.s32 1, %s21
      %s31 = scalar_select %p28, %s30, %s21
      %p32 = scmp.ge.s32.totalorder %s31, 2
      %s33 = scalar_select %p32, 0, %s31
      %s34 = ssub.s32 %s21, %s33
      %s35 = ssub.s32 %s22, %s29
      %s36 = sor.u32 %s34, %s35
      %p37 = scmp.eq.s32.totalorder %s36, 0
      %s39 = sadd.s32 %s38, 1
      %s40 = scalar_select %p37, %s38, %s39
      %p43 = pneg %p37
      %p44 = scmp.eq.s32.totalorder %s14, 1
      %p45 = por %p43, %p44
      %p46 = scmp.ne.s32.totalorder %s38, %s41
      %p47 = scmp.eq.s32.totalorder %s14, 0
      %p48 = por %p46, %p47
      %p49 = scmp.ne.s32.totalorder %s38, %s41
      %p50 = scmp.eq.s32.totalorder %s19, 1
      %p51 = por %p49, %p50
      %p52 = scmp.ne.s32.totalorder %s41, %s42
      %p53 = scmp.eq.s32.totalorder %s19, 0
      %p54 = por %p52, %p53
      %p55 = scmp.ne.s32.totalorder %s41, %s42
      %p56 = scmp.eq.s32.totalorder %s20, 1
      %p57 = por %p55, %p56
      %p59 = scmp.ne.s32.totalorder %s42, %s58
      %p60 = scmp.eq.s32.totalorder %s20, 0
      %p61 = por %p59, %p60
      %s63 = sadd.s32 %s62, 1
      %p66 = scmp.eq.s32.totalorder %s14, 1
      %p67 = scmp.ne.s32.totalorder %s62, %s64
      %p68 = scmp.eq.s32.totalorder %s14, 0
      %p69 = por %p67, %p68
      %p70 = scmp.ne.s32.totalorder %s62, %s64
      %p71 = scmp.eq.s32.totalorder %s19, 1
      %p72 = por %p70, %p71
      %p73 = scmp.ne.s32.totalorder %s64, %s65
      %p74 = scmp.eq.s32.totalorder %s19, 0
      %p75 = por %p73, %p74
      %p76 = scmp.ne.s32.totalorder %s64, %s65
      %p77 = scmp.eq.s32.totalorder %s20, 1
      %p78 = por %p76, %p77
      %p80 = scmp.ne.s32.totalorder %s65, %s79
      %p81 = scmp.eq.s32.totalorder %s20, 0
      %p82 = por %p80, %p81
      %s84 = sadd.s32 %s83, 1
      %p87 = scmp.eq.s32.totalorder %s14, 1
      %p88 = scmp.ne.s32.totalorder %s83, %s85
      %p89 = scmp.eq.s32.totalorder %s14, 0
      %p90 = por %p88, %p89
      %p91 = scmp.ne.s32.totalorder %s83, %s85
      %p92 = scmp.eq.s32.totalorder %s19, 1
      %p93 = por %p91, %p92
      %p94 = scmp.ne.s32.totalorder %s85, %s86
      %p95 = scmp.eq.s32.totalorder %s19, 0
      %p96 = por %p94, %p95
      %p97 = scmp.ne.s32.totalorder %s85, %s86
      %p98 = scmp.eq.s32.totalorder %s20, 1
      %p99 = por %p97, %p98
      %p101 = scmp.ne.s32.totalorder %s86, %s100
      %p102 = scmp.eq.s32.totalorder %s20, 0
      %p103 = por %p101, %p102
      %s105 = sadd.s32 %s104, 1
      %p108 = scmp.eq.s32.totalorder %s14, 1
      %p109 = scmp.ne.s32.totalorder %s104, %s106
      %p110 = scmp.eq.s32.totalorder %s14, 0
      %p111 = por %p109, %p110
      %p112 = scmp.ne.s32.totalorder %s104, %s106
      %p113 = scmp.eq.s32.totalorder %s19, 1
      %p114 = por %p112, %p113
      %p115 = scmp.ne.s32.totalorder %s106, %s107
      %p116 = scmp.eq.s32.totalorder %s19, 0
      %p117 = por %p115, %p116
      %p118 = scmp.ne.s32.totalorder %s106, %s107
      %p119 = scmp.eq.s32.totalorder %s20, 1
      %p120 = por %p118, %p119
      %p122 = scmp.ne.s32.totalorder %s107, %s121
      %p123 = scmp.eq.s32.totalorder %s20, 0
      %p124 = por %p122, %p123
      %s126 = sadd.s32 %s125, 1
      %p129 = scmp.eq.s32.totalorder %s14, 1
      %p130 = scmp.ne.s32.totalorder %s125, %s127
      %p131 = scmp.eq.s32.totalorder %s14, 0
      %p132 = por %p130, %p131
      %p133 = scmp.ne.s32.totalorder %s125, %s127
      %p134 = scmp.eq.s32.totalorder %s19, 1
      %p135 = por %p133, %p134
      %p136 = scmp.ne.s32.totalorder %s127, %s128
      %p137 = scmp.eq.s32.totalorder %s19, 0
      %p138 = por %p136, %p137
      %p139 = scmp.ne.s32.totalorder %s127, %s128
      %p140 = scmp.eq.s32.totalorder %s20, 1
      %p141 = por %p139, %p140
      %p143 = scmp.ne.s32.totalorder %s128, %s142
      %p144 = scmp.eq.s32.totalorder %s20, 0
      %p145 = por %p143, %p144
      %s146 = ssub.s32 %s21, %s33
      %s147 = ssub.s32 %s22, %s29
      %s148 = sor.u32 %s146, %s147
      %p149 = scmp.eq.s32.totalorder %s148, 0
      %s151 = sadd.s32 %s150, 1
      %s152 = scalar_select %p149, %s150, %s151
      %p155 = pneg %p149
      %p156 = scmp.eq.s32.totalorder %s14, 1
      %p157 = por %p155, %p156
      %p158 = scmp.ne.s32.totalorder %s150, %s153
      %p159 = scmp.eq.s32.totalorder %s14, 0
      %p160 = por %p158, %p159
      %p161 = scmp.ne.s32.totalorder %s150, %s153
      %p162 = scmp.eq.s32.totalorder %s19, 1
      %p163 = por %p161, %p162
      %p164 = scmp.ne.s32.totalorder %s153, %s154
      %p165 = scmp.eq.s32.totalorder %s19, 0
      %p166 = por %p164, %p165
      %p167 = scmp.ne.s32.totalorder %s153, %s154
      %p168 = scmp.eq.s32.totalorder %s20, 1
      %p169 = por %p167, %p168
      %p171 = scmp.ne.s32.totalorder %s154, %s170
      %p172 = scmp.eq.s32.totalorder %s20, 0
      %p173 = por %p171, %p172
      %p174 = scmp.le.s32.totalorder 1, %s14
      %p175 = scmp.lt.s32.totalorder %s14, 3
      %p176 = pnand %p174, %p175
      %p177 = pneg %p176
      // Predicated region
      $region9: #{tpu_custom_call.1} parent=5 // pred_check
        _
      $region10: #{tpu_custom_call.1} parent=5 // pred_check_branch
        %179 = sbr.rel (%p176) target = $region12
      $region11: #{tpu_custom_call.1} parent=5 // pred_region
        %s180 = ssub.s32 %s14, 1
        // Predicated region
        $region13: #{tpu_custom_call.1} parent=11 // pred_check
          %p181 = pneg %p75
        $region14: #{tpu_custom_call.1} parent=11 // pred_check_branch
          %183 = sbr.rel (%p181) target = $region16
        $region15: #{tpu_custom_call.1} parent=11 // pred_region
          _
        $region16: #{tpu_custom_call.1} parent=11 // pred_fallthru
          _
        // Predicated region
        $region17: #{tpu_custom_call.1} parent=11 // pred_check
          %p184 = pneg %p96
        $region18: #{tpu_custom_call.1} parent=11 // pred_check_branch
          %186 = sbr.rel (%p184) target = $region20
        $region19: #{tpu_custom_call.1} parent=11 // pred_region
          _
        $region20: #{tpu_custom_call.1} parent=11 // pred_fallthru
          _
        // Predicated region
        $region21: #{tpu_custom_call.1} parent=11 // pred_check
          %p187 = pneg %p117
        $region22: #{tpu_custom_call.1} parent=11 // pred_check_branch
          %189 = sbr.rel (%p187) target = $region24
        $region23: #{tpu_custom_call.1} parent=11 // pred_region
          _
        $region24: #{tpu_custom_call.1} parent=11 // pred_fallthru
          _
        // Predicated region
        $region25: #{tpu_custom_call.1} parent=11 // pred_check
          %p190 = pneg %p138
        $region26: #{tpu_custom_call.1} parent=11 // pred_check_branch
          %192 = sbr.rel (%p190) target = $region28
        $region27: #{tpu_custom_call.1} parent=11 // pred_region
          _
        $region28: #{tpu_custom_call.1} parent=11 // pred_fallthru
          _
      $region12: #{tpu_custom_call.1} parent=5 // pred_fallthru
        _
      %p193 = scmp.lt.s32.totalorder %s14, 2
      // Predicated region
      $region29: #{tpu_custom_call.1} parent=5 // pred_check
        %p194 = pneg %p193
      $region30: #{tpu_custom_call.1} parent=5 // pred_check_branch
        %196 = sbr.rel (%p194) target = $region32
      $region31: #{tpu_custom_call.1} parent=5 // pred_region
        // Predicated region
        $region33: #{tpu_custom_call.1} parent=31 // pred_check
          %p197 = pneg %p48
        $region34: #{tpu_custom_call.1} parent=31 // pred_check_branch
          %199 = sbr.rel (%p197) target = $region36
        $region35: #{tpu_custom_call.1} parent=31 // pred_region
          %p200 = scmp.lt.s32.totalorder %s21, 1
          %s201 = scalar_select %p200, %s21, 1
          %p202 = scmp.lt.s32.totalorder %s22, 0
          %s203 = scalar_select %p202, %s22, 0
          %s204 = smul.addr %s201, 4
          %s205 = sadd.s32 %s203, %s204
          %s206 = smul.addr %s205, 2
          %s207 = scalar_lea.vmem %s0, %s206
        $region36: #{tpu_custom_call.1} parent=31 // pred_fallthru
          _
      $region32: #{tpu_custom_call.1} parent=5 // pred_fallthru
        _
      %p208 = scmp.le.s32.totalorder 1, %s14
      %p209 = scmp.lt.s32.totalorder %s14, 3
      %p210 = pnand %p208, %p209
      %p211 = pneg %p210
      // Predicated region
      $region37: #{tpu_custom_call.1} parent=5 // pred_check
        _
      $region38: #{tpu_custom_call.1} parent=5 // pred_check_branch
        %213 = sbr.rel (%p210) target = $region40
      $region39: #{tpu_custom_call.1} parent=5 // pred_region
        %s214 = ssub.s32 %s14, 1
        %p215 = scmp.lt.s32.totalorder %s23, 1
        %s216 = scalar_select %p215, %s23, 1
        %p217 = scmp.lt.s32.totalorder %s24, 0
        %s218 = scalar_select %p217, %s24, 0
        %s219 = smul.addr %s216, 4
        %s220 = sadd.s32 %s218, %s219
        %s221 = smul.addr %s220, 2
        %s222 = scalar_lea.vmem %s0, %s221
        %p223 = pneg %p54
        %p224 = pneg %p51
        %p225 = pneg %p75
        %p226 = pneg %p72
        %p227 = pneg %p96
        %p228 = pneg %p93
        %p229 = pneg %p117
        %p230 = pneg %p114
        %p231 = pneg %p138
        %p232 = pneg %p135
        %p233 = pneg %p166
        %p234 = pneg %p163
        %s235 = sand.u32 %s153, 1
        %s236 = scalar_lea.sflag [#allocation3], %s235
        %s237 = sand.u32 %s153, 1
        %s238 = smul.addr %s237, 8
        %s239 = scalar_lea.vmem [#allocation2], %s238
        %p240 = scmp.lt.s32.totalorder %s23, 1
        %s241 = scalar_select %p240, %s23, 1
        %p242 = scmp.lt.s32.totalorder %s24, 0
        %s243 = scalar_select %p242, %s24, 0
        %s244 = smul.addr %s241, 4
        %s245 = sadd.s32 %s243, %s244
        %s246 = smul.addr %s245, 2
        %s247 = scalar_lea.vmem %s0, %s246
        %v248 = vld [vmem:[%s1] sm:$0xff]
        %v249 = vld [vmem:[%s1 + $0x8] sm:$0xff]
        %v250 = vld [vmem:[%s1 + $0x10] sm:$0xff]
        %v251 = vld [vmem:[%s1 + $0x18] sm:$0xff]
        %v252 = vld [vmem:[%s1 + $0x20] sm:$0xff]
        %v253 = vld [vmem:[%s1 + $0x28] sm:$0xff]
        %v254 = vld [vmem:[%s1 + $0x30] sm:$0xff]
        %v255 = vld [vmem:[%s1 + $0x38] sm:$0xff]
        %v256 = vld [vmem:[%s1 + $0x40] sm:$0xff]
        %v257 = vld [vmem:[%s1 + $0x48] sm:$0xff]
        %v258 = vld [vmem:[%s1 + $0x50] sm:$0xff]
        %v259 = vld [vmem:[%s1 + $0x58] sm:$0xff]
        %v260 = vld [vmem:[%s1 + $0x60] sm:$0xff]
        %v261 = vld [vmem:[%s1 + $0x68] sm:$0xff]
        %v262 = vld [vmem:[%s1 + $0x70] sm:$0xff]
        %v263 = vld [vmem:[%s1 + $0x78] sm:$0xff]
        %v264 = vld [vmem:[%s1 + $0x80] sm:$0xff]
        %v265 = vld [vmem:[%s1 + $0x88] sm:$0xff]
        %v266 = vld [vmem:[%s1 + $0x90] sm:$0xff]
        %v267 = vld [vmem:[%s1 + $0x98] sm:$0xff]
        %v268 = vld [vmem:[%s1 + $0xa0] sm:$0xff]
        %v269 = vld [vmem:[%s1 + $0xa8] sm:$0xff]
        %v270 = vld [vmem:[%s1 + $0xb0] sm:$0xff]
        %v271 = vld [vmem:[%s1 + $0xb8] sm:$0xff]
        %v272 = vld [vmem:[%s1 + $0xc0] sm:$0xff]
        %v273 = vld [vmem:[%s1 + $0xc8] sm:$0xff]
        %v274 = vld [vmem:[%s1 + $0xd0] sm:$0xff]
        %v275 = vld [vmem:[%s1 + $0xd8] sm:$0xff]
        %v276 = vld [vmem:[%s1 + $0xe0] sm:$0xff]
        %v277 = vld [vmem:[%s1 + $0xe8] sm:$0xff]
        %v278 = vld [vmem:[%s1 + $0xf0] sm:$0xff]
        %v279 = vld [vmem:[%s1 + $0xf8] sm:$0xff]
        %v280 = vld [vmem:[%s1 + $0x100] sm:$0xff]
        %v281 = vld [vmem:[%s1 + $0x108] sm:$0xff]
        %v282 = vld [vmem:[%s1 + $0x110] sm:$0xff]
        %v283 = vld [vmem:[%s1 + $0x118] sm:$0xff]
        %v284 = vld [vmem:[%s1 + $0x120] sm:$0xff]
        %v285 = vld [vmem:[%s1 + $0x128] sm:$0xff]
        %v286 = vld [vmem:[%s1 + $0x130] sm:$0xff]
        %v287 = vld [vmem:[%s1 + $0x138] sm:$0xff]
        %v288 = vld [vmem:[%s1 + $0x140] sm:$0xff]
        %v289 = vld [vmem:[%s1 + $0x148] sm:$0xff]
        %v290 = vld [vmem:[%s1 + $0x150] sm:$0xff]
        %v291 = vld [vmem:[%s1 + $0x158] sm:$0xff]
        %v292 = vld [vmem:[%s1 + $0x160] sm:$0xff]
        %v293 = vld [vmem:[%s1 + $0x168] sm:$0xff]
        %v294 = vld [vmem:[%s1 + $0x170] sm:$0xff]
        %v295 = vld [vmem:[%s1 + $0x178] sm:$0xff]
        %v296 = vld [vmem:[%s2] sm:$0xf]
        %v297 = vld [vmem:[%s3] sm:$0xf]
        %v298 = vld [vmem:[%s4] sm:$0xff]
        %v299 = vld [vmem:[%s4 + $0x8] sm:$0xff]
        %v300 = vld [vmem:[%s4 + $0x10] sm:$0xff]
        %v301 = vld [vmem:[%s4 + $0x18] sm:$0xff]
        %v302 = vld [vmem:[%s4 + $0x20] sm:$0xff]
        %v303 = vld [vmem:[%s4 + $0x28] sm:$0xff]
        %v304 = vld [vmem:[%s4 + $0x30] sm:$0xff]
        %v305 = vld [vmem:[%s4 + $0x38] sm:$0xff]
        %v306 = vld [vmem:[%s4 + $0x40] sm:$0xff]
        %v307 = vld [vmem:[%s4 + $0x48] sm:$0xff]
        %v308 = vld [vmem:[%s4 + $0x50] sm:$0xff]
        %v309 = vld [vmem:[%s4 + $0x58] sm:$0xff]
        %v310 = vld [vmem:[%s4 + $0x60] sm:$0xff]
        %v311 = vld [vmem:[%s4 + $0x68] sm:$0xff]
        %v312 = vld [vmem:[%s4 + $0x70] sm:$0xff]
        %v313 = vld [vmem:[%s4 + $0x78] sm:$0xff]
        %v314 = vld [vmem:[%s247] sm:$0x1]
        %v315 = vld [vmem:[%s247 + $0x2] sm:$0x1]
        %v316 = vld [vmem:[%s247 + $0x4] sm:$0x1]
        %v317 = vld [vmem:[%s247 + $0x6] sm:$0x1]
        %v322 = vrot.slane %v315, 7
        %vm323 = vcmask 1041409
        %v324 = vsel %vm323, %v322, %v314
        %v325 = vrot.slane %v316, 6
        %vm326 = vcmask 1042434
        %v327 = vsel %vm326, %v325, %v324
        %v328 = vrot.slane %v317, 5
        %vm329 = vcmask 1043459
        %v330 = vsel %vm329, %v328, %v327
        %vm331 = vcmask 31744
        %v333 = vsel %vm331, %v248, 0
        %v336 = vsel %vm331, %v249, 0
        %v339 = vsel %vm331, %v250, 0
        %v342 = vsel %vm331, %v251, 0
        %v345 = vsel %vm331, %v252, 0
        %v348 = vsel %vm331, %v253, 0
        %v351 = vsel %vm331, %v254, 0
        %v354 = vsel %vm331, %v255, 0
        %v357 = vsel %vm331, %v256, 0
        %v360 = vsel %vm331, %v257, 0
        %v363 = vsel %vm331, %v258, 0
        %v366 = vsel %vm331, %v259, 0
        %v369 = vsel %vm331, %v260, 0
        %v372 = vsel %vm331, %v261, 0
        %v375 = vsel %vm331, %v262, 0
        %v378 = vsel %vm331, %v263, 0
        %v381 = vsel %vm331, %v264, 0
        %v384 = vsel %vm331, %v265, 0
        %v387 = vsel %vm331, %v266, 0
        %v390 = vsel %vm331, %v267, 0
        %v393 = vsel %vm331, %v268, 0
        %v396 = vsel %vm331, %v269, 0
        %v399 = vsel %vm331, %v270, 0
        %v402 = vsel %vm331, %v271, 0
        %v405 = vsel %vm331, %v272, 0
        %v408 = vsel %vm331, %v273, 0
        %v411 = vsel %vm331, %v274, 0
        %v414 = vsel %vm331, %v275, 0
        %v417 = vsel %vm331, %v276, 0
        %v420 = vsel %vm331, %v277, 0
        %v423 = vsel %vm331, %v278, 0
        %v426 = vsel %vm331, %v279, 0
        %v429 = vsel %vm331, %v280, 0
        %v432 = vsel %vm331, %v281, 0
        %v435 = vsel %vm331, %v282, 0
        %v438 = vsel %vm331, %v283, 0
        %v441 = vsel %vm331, %v284, 0
        %v444 = vsel %vm331, %v285, 0
        %v447 = vsel %vm331, %v286, 0
        %v450 = vsel %vm331, %v287, 0
        %v453 = vsel %vm331, %v288, 0
        %v456 = vsel %vm331, %v289, 0
        %v459 = vsel %vm331, %v290, 0
        %v462 = vsel %vm331, %v291, 0
        %v465 = vsel %vm331, %v292, 0
        %v468 = vsel %vm331, %v293, 0
        %v471 = vsel %vm331, %v294, 0
        %v474 = vsel %vm331, %v295, 0
        %vm476 = vcmask 1043456
        %v477 = vsel %vm476, %v330, 0
        %479 = vmatprep.subr.mxu0 0.0
        %480 = vmatpush1.msra.mxu0 %v477
        %481 = vmatprep.subr.mxu0 0.0
        %482 = vmatpush1.msra.mxu0 0.0
        %483 = vmatprep.subr.mxu0 0.0
        %484 = vmatpush1.msra.mxu0 0.0
        %485 = vmatprep.subr.mxu0 0.0
        %486 = vmatpush1.msra.mxu0 0.0
        %487 = vmatprep.subr.mxu0 0.0
        %488 = vmatpush1.msra.mxu0 0.0
        %489 = vmatprep.subr.mxu0 0.0
        %490 = vmatpush1.msra.mxu0 0.0
        %491 = vmatprep.subr.mxu0 0.0
        %492 = vmatpush1.msra.mxu0 0.0
        %493 = vmatprep.subr.mxu0 0.0
        %494 = vmatpush1.msra.mxu0 0.0
        %495 = vmatprep.subr.mxu0 0.0
        %496 = vmatpush1.msra.mxu0 0.0
        %497 = vmatprep.subr.mxu0 0.0
        %498 = vmatpush1.msra.mxu0 0.0
        %499 = vmatprep.subr.mxu0 0.0
        %500 = vmatpush1.msra.mxu0 0.0
        %501 = vmatprep.subr.mxu0 0.0
        %502 = vmatpush1.msra.mxu0 0.0
        %503 = vmatprep.subr.mxu0 0.0
        %504 = vmatpush1.msra.mxu0 0.0
        %505 = vmatprep.subr.mxu0 0.0
        %506 = vmatpush1.msra.mxu0 0.0
        %507 = vmatprep.subr.mxu0 0.0
        %508 = vmatpush1.msra.mxu0 0.0
        %509 = vmatprep.subr.mxu0 0.0
        %510 = vmatpush1.msra.mxu0 0.0
        %511 = vmatprep.subr.mxu0 0.0
        %512 = vmatpush1.msra.mxu0 0.0
        %513 = vmatprep.subr.mxu0 0.0
        %514 = vmatpush1.msra.mxu0 0.0
        %515 = vmatprep.subr.mxu0 0.0
        %516 = vmatpush1.msra.mxu0 0.0
        %517 = vmatprep.subr.mxu0 0.0
        %518 = vmatpush1.msra.mxu0 0.0
        %519 = vmatprep.subr.mxu0 0.0
        %520 = vmatpush1.msra.mxu0 0.0
        %521 = vmatprep.subr.mxu0 0.0
        %522 = vmatpush1.msra.mxu0 0.0
        %523 = vmatprep.subr.mxu0 0.0
        %524 = vmatpush1.msra.mxu0 0.0
        %525 = vmatprep.subr.mxu0 0.0
        %526 = vmatpush1.msra.mxu0 0.0
        %527 = vmatprep.subr.mxu0 0.0
        %528 = vmatpush1.msra.mxu0 0.0
        %529 = vmatprep.subr.mxu0 0.0
        %530 = vmatpush1.msra.mxu0 0.0
        %531 = vmatprep.subr.mxu0 0.0
        %532 = vmatpush1.msra.mxu0 0.0
        %533 = vmatprep.subr.mxu0 0.0
        %534 = vmatpush1.msra.mxu0 0.0
        %535 = vmatprep.subr.mxu0 0.0
        %536 = vmatpush1.msra.mxu0 0.0
        %537 = vmatprep.subr.mxu0 0.0
        %538 = vmatpush1.msra.mxu0 0.0
        %539 = vmatprep.subr.mxu0 0.0
        %540 = vmatpush1.msra.mxu0 0.0
        %541 = vmatprep.subr.mxu0 0.0
        %542 = vmatpush1.msra.mxu0 0.0
        %543 = vmatprep.mubr.f32.mxu0 0.0
        %544 = vmatmul.mubr.f32.gmra.mrb[0].mxu0 %v333
        %v545 = vpop.f32.mrb[0].mxu0
        %v546 = vadd.f32 0.0, %v545
        %v547 = vpop.f32.mrb[0].mxu0
        %548 = vmatprep.mubr.f32.mxu0 0.0
        %549 = vmatmul.mubr.f32.gmra.mrb[0].mxu0 %v336
        %v550 = vpop.f32.mrb[0].mxu0
        %v551 = vadd.f32 0.0, %v550
        %v552 = vpop.f32.mrb[0].mxu0
        %553 = vmatprep.mubr.f32.mxu0 0.0
        %554 = vmatmul.mubr.f32.gmra.mrb[0].mxu0 %v339
        %v555 = vpop.f32.mrb[0].mxu0
        %v556 = vadd.f32 0.0, %v555
        %v557 = vpop.f32.mrb[0].mxu0
        %558 = vmatprep.mubr.f32.mxu0 0.0
        %559 = vmatmul.mubr.f32.gmra.mrb[0].mxu0 %v342
        %v560 = vpop.f32.mrb[0].mxu0
        %v561 = vadd.f32 0.0, %v560
        %v562 = vpop.f32.mrb[0].mxu0
        %563 = vmatprep.mubr.f32.mxu0 0.0
        %564 = vmatmul.mubr.f32.gmra.mrb[0].mxu0 %v345
        %v565 = vpop.f32.mrb[0].mxu0
        %v566 = vadd.f32 0.0, %v565
        %v567 = vpop.f32.mrb[0].mxu0
        %568 = vmatprep.mubr.f32.mxu0 0.0
        %569 = vmatmul.mubr.f32.gmra.mrb[0].mxu0 %v348
        %v570 = vpop.f32.mrb[0].mxu0
        %v571 = vadd.f32 0.0, %v570
        %v572 = vpop.f32.mrb[0].mxu0
        %573 = vmatprep.mubr.f32.mxu0 0.0
        %574 = vmatmul.mubr.f32.gmra.mrb[0].mxu0 %v351
        %v575 = vpop.f32.mrb[0].mxu0
        %v576 = vadd.f32 0.0, %v575
        %v577 = vpop.f32.mrb[0].mxu0
        %578 = vmatprep.mubr.f32.mxu0 0.0
        %579 = vmatmul.mubr.f32.gmra.mrb[0].mxu0 %v354
        %v580 = vpop.f32.mrb[0].mxu0
        %v581 = vadd.f32 0.0, %v580
        %v582 = vpop.f32.mrb[0].mxu0
        %583 = vmatprep.mubr.f32.mxu0 0.0
        %584 = vmatmul.mubr.f32.gmra.mrb[0].mxu0 %v357
        %v585 = vpop.f32.mrb[0].mxu0
        %v586 = vadd.f32 0.0, %v585
        %v587 = vpop.f32.mrb[0].mxu0
        %588 = vmatprep.mubr.f32.mxu0 0.0
        %589 = vmatmul.mubr.f32.gmra.mrb[0].mxu0 %v360
        %v590 = vpop.f32.mrb[0].mxu0
        %v591 = vadd.f32 0.0, %v590
        %v592 = vpop.f32.mrb[0].mxu0
        %593 = vmatprep.mubr.f32.mxu0 0.0
        %594 = vmatmul.mubr.f32.gmra.mrb[0].mxu0 %v363
        %v595 = vpop.f32.mrb[0].mxu0
        %v596 = vadd.f32 0.0, %v595
        %v597 = vpop.f32.mrb[0].mxu0
        %598 = vmatprep.mubr.f32.mxu0 0.0
        %599 = vmatmul.mubr.f32.gmra.mrb[0].mxu0 %v366
        %v600 = vpop.f32.mrb[0].mxu0
        %v601 = vadd.f32 0.0, %v600
        %v602 = vpop.f32.mrb[0].mxu0
        %603 = vmatprep.mubr.f32.mxu0 0.0
        %604 = vmatmul.mubr.f32.gmra.mrb[0].mxu0 %v369
        %v605 = vpop.f32.mrb[0].mxu0
        %v606 = vadd.f32 0.0, %v605
        %v607 = vpop.f32.mrb[0].mxu0
        %608 = vmatprep.mubr.f32.mxu0 0.0
        %609 = vmatmul.mubr.f32.gmra.mrb[0].mxu0 %v372
        %v610 = vpop.f32.mrb[0].mxu0
        %v611 = vadd.f32 0.0, %v610
        %v612 = vpop.f32.mrb[0].mxu0
        %613 = vmatprep.mubr.f32.mxu0 0.0
        %614 = vmatmul.mubr.f32.gmra.mrb[0].mxu0 %v375
        %v615 = vpop.f32.mrb[0].mxu0
        %v616 = vadd.f32 0.0, %v615
        %v617 = vpop.f32.mrb[0].mxu0
        %618 = vmatprep.mubr.f32.mxu0 0.0
        %619 = vmatmul.mubr.f32.gmra.mrb[0].mxu0 %v378
        %v620 = vpop.f32.mrb[0].mxu0
        %v621 = vadd.f32 0.0, %v620
        %v622 = vpop.f32.mrb[0].mxu0
        %623 = vmatprep.mubr.f32.mxu0 0.0
        %624 = vmatmul.mubr.f32.gmra.mrb[0].mxu0 %v381
        %v625 = vpop.f32.mrb[0].mxu0
        %v626 = vadd.f32 0.0, %v625
        %v627 = vpop.f32.mrb[0].mxu0
        %628 = vmatprep.mubr.f32.mxu0 0.0
        %629 = vmatmul.mubr.f32.gmra.mrb[0].mxu0 %v384
        %v630 = vpop.f32.mrb[0].mxu0
        %v631 = vadd.f32 0.0, %v630
        %v632 = vpop.f32.mrb[0].mxu0
        %633 = vmatprep.mubr.f32.mxu0 0.0
        %634 = vmatmul.mubr.f32.gmra.mrb[0].mxu0 %v387
        %v635 = vpop.f32.mrb[0].mxu0
        %v636 = vadd.f32 0.0, %v635
        %v637 = vpop.f32.mrb[0].mxu0
        %638 = vmatprep.mubr.f32.mxu0 0.0
        %639 = vmatmul.mubr.f32.gmra.mrb[0].mxu0 %v390
        %v640 = vpop.f32.mrb[0].mxu0
        %v641 = vadd.f32 0.0, %v640
        %v642 = vpop.f32.mrb[0].mxu0
        %643 = vmatprep.mubr.f32.mxu0 0.0
        %644 = vmatmul.mubr.f32.gmra.mrb[0].mxu0 %v393
        %v645 = vpop.f32.mrb[0].mxu0
        %v646 = vadd.f32 0.0, %v645
        %v647 = vpop.f32.mrb[0].mxu0
        %648 = vmatprep.mubr.f32.mxu0 0.0
        %649 = vmatmul.mubr.f32.gmra.mrb[0].mxu0 %v396
        %v650 = vpop.f32.mrb[0].mxu0
        %v651 = vadd.f32 0.0, %v650
        %v652 = vpop.f32.mrb[0].mxu0
        %653 = vmatprep.mubr.f32.mxu0 0.0
        %654 = vmatmul.mubr.f32.gmra.mrb[0].mxu0 %v399
        %v655 = vpop.f32.mrb[0].mxu0
        %v656 = vadd.f32 0.0, %v655
        %v657 = vpop.f32.mrb[0].mxu0
        %658 = vmatprep.mubr.f32.mxu0 0.0
        %659 = vmatmul.mubr.f32.gmra.mrb[0].mxu0 %v402
        %v660 = vpop.f32.mrb[0].mxu0
        %v661 = vadd.f32 0.0, %v660
        %v662 = vpop.f32.mrb[0].mxu0
        %663 = vmatprep.mubr.f32.mxu0 0.0
        %664 = vmatmul.mubr.f32.gmra.mrb[0].mxu0 %v405
        %v665 = vpop.f32.mrb[0].mxu0
        %v666 = vadd.f32 0.0, %v665
        %v667 = vpop.f32.mrb[0].mxu0
        %668 = vmatprep.mubr.f32.mxu0 0.0
        %669 = vmatmul.mubr.f32.gmra.mrb[0].mxu0 %v408
        %v670 = vpop.f32.mrb[0].mxu0
        %v671 = vadd.f32 0.0, %v670
        %v672 = vpop.f32.mrb[0].mxu0
        %673 = vmatprep.mubr.f32.mxu0 0.0
        %674 = vmatmul.mubr.f32.gmra.mrb[0].mxu0 %v411
        %v675 = vpop.f32.mrb[0].mxu0
        %v676 = vadd.f32 0.0, %v675
        %v677 = vpop.f32.mrb[0].mxu0
        %678 = vmatprep.mubr.f32.mxu0 0.0
        %679 = vmatmul.mubr.f32.gmra.mrb[0].mxu0 %v414
        %v680 = vpop.f32.mrb[0].mxu0
        %v681 = vadd.f32 0.0, %v680
        %v682 = vpop.f32.mrb[0].mxu0
        %683 = vmatprep.mubr.f32.mxu0 0.0
        %684 = vmatmul.mubr.f32.gmra.mrb[0].mxu0 %v417
        %v685 = vpop.f32.mrb[0].mxu0
        %v686 = vadd.f32 0.0, %v685
        %v687 = vpop.f32.mrb[0].mxu0
        %688 = vmatprep.mubr.f32.mxu0 0.0
        %689 = vmatmul.mubr.f32.gmra.mrb[0].mxu0 %v420
        %v690 = vpop.f32.mrb[0].mxu0
        %v691 = vadd.f32 0.0, %v690
        %v692 = vpop.f32.mrb[0].mxu0
        %693 = vmatprep.mubr.f32.mxu0 0.0
        %694 = vmatmul.mubr.f32.gmra.mrb[0].mxu0 %v423
        %v695 = vpop.f32.mrb[0].mxu0
        %v696 = vadd.f32 0.0, %v695
        %v697 = vpop.f32.mrb[0].mxu0
        %698 = vmatprep.mubr.f32.mxu0 0.0
        %699 = vmatmul.mubr.f32.gmra.mrb[0].mxu0 %v426
        %v700 = vpop.f32.mrb[0].mxu0
        %v701 = vadd.f32 0.0, %v700
        %v702 = vpop.f32.mrb[0].mxu0
        %703 = vmatprep.mubr.f32.mxu0 0.0
        %704 = vmatmul.mubr.f32.gmra.mrb[0].mxu0 %v429
        %v705 = vpop.f32.mrb[0].mxu0
        %v706 = vadd.f32 0.0, %v705
        %v707 = vpop.f32.mrb[0].mxu0
        %708 = vmatprep.mubr.f32.mxu0 0.0
        %709 = vmatmul.mubr.f32.gmra.mrb[0].mxu0 %v432
        %v710 = vpop.f32.mrb[0].mxu0
        %v711 = vadd.f32 0.0, %v710
        %v712 = vpop.f32.mrb[0].mxu0
        %713 = vmatprep.mubr.f32.mxu0 0.0
        %714 = vmatmul.mubr.f32.gmra.mrb[0].mxu0 %v435
        %v715 = vpop.f32.mrb[0].mxu0
        %v716 = vadd.f32 0.0, %v715
        %v717 = vpop.f32.mrb[0].mxu0
        %718 = vmatprep.mubr.f32.mxu0 0.0
        %719 = vmatmul.mubr.f32.gmra.mrb[0].mxu0 %v438
        %v720 = vpop.f32.mrb[0].mxu0
        %v721 = vadd.f32 0.0, %v720
        %v722 = vpop.f32.mrb[0].mxu0
        %723 = vmatprep.mubr.f32.mxu0 0.0
        %724 = vmatmul.mubr.f32.gmra.mrb[0].mxu0 %v441
        %v725 = vpop.f32.mrb[0].mxu0
        %v726 = vadd.f32 0.0, %v725
        %v727 = vpop.f32.mrb[0].mxu0
        %728 = vmatprep.mubr.f32.mxu0 0.0
        %729 = vmatmul.mubr.f32.gmra.mrb[0].mxu0 %v444
        %v730 = vpop.f32.mrb[0].mxu0
        %v731 = vadd.f32 0.0, %v730
        %v732 = vpop.f32.mrb[0].mxu0
        %733 = vmatprep.mubr.f32.mxu0 0.0
        %734 = vmatmul.mubr.f32.gmra.mrb[0].mxu0 %v447
        %v735 = vpop.f32.mrb[0].mxu0
        %v736 = vadd.f32 0.0, %v735
        %v737 = vpop.f32.mrb[0].mxu0
        %738 = vmatprep.mubr.f32.mxu0 0.0
        %739 = vmatmul.mubr.f32.gmra.mrb[0].mxu0 %v450
        %v740 = vpop.f32.mrb[0].mxu0
        %v741 = vadd.f32 0.0, %v740
        %v742 = vpop.f32.mrb[0].mxu0
        %743 = vmatprep.mubr.f32.mxu0 0.0
        %744 = vmatmul.mubr.f32.gmra.mrb[0].mxu0 %v453
        %v745 = vpop.f32.mrb[0].mxu0
        %v746 = vadd.f32 0.0, %v745
        %v747 = vpop.f32.mrb[0].mxu0
        %748 = vmatprep.mubr.f32.mxu0 0.0
        %749 = vmatmul.mubr.f32.gmra.mrb[0].mxu0 %v456
        %v750 = vpop.f32.mrb[0].mxu0
        %v751 = vadd.f32 0.0, %v750
        %v752 = vpop.f32.mrb[0].mxu0
        %753 = vmatprep.mubr.f32.mxu0 0.0
        %754 = vmatmul.mubr.f32.gmra.mrb[0].mxu0 %v459
        %v755 = vpop.f32.mrb[0].mxu0
        %v756 = vadd.f32 0.0, %v755
        %v757 = vpop.f32.mrb[0].mxu0
        %758 = vmatprep.mubr.f32.mxu0 0.0
        %759 = vmatmul.mubr.f32.gmra.mrb[0].mxu0 %v462
        %v760 = vpop.f32.mrb[0].mxu0
        %v761 = vadd.f32 0.0, %v760
        %v762 = vpop.f32.mrb[0].mxu0
        %763 = vmatprep.mubr.f32.mxu0 0.0
        %764 = vmatmul.mubr.f32.gmra.mrb[0].mxu0 %v465
        %v765 = vpop.f32.mrb[0].mxu0
        %v766 = vadd.f32 0.0, %v765
        %v767 = vpop.f32.mrb[0].mxu0
        %768 = vmatprep.mubr.f32.mxu0 0.0
        %769 = vmatmul.mubr.f32.gmra.mrb[0].mxu0 %v468
        %v770 = vpop.f32.mrb[0].mxu0
        %v771 = vadd.f32 0.0, %v770
        %v772 = vpop.f32.mrb[0].mxu0
        %773 = vmatprep.mubr.f32.mxu0 0.0
        %774 = vmatmul.mubr.f32.gmra.mrb[0].mxu0 %v471
        %v775 = vpop.f32.mrb[0].mxu0
        %v776 = vadd.f32 0.0, %v775
        %v777 = vpop.f32.mrb[0].mxu0
        %778 = vmatprep.mubr.f32.mxu0 0.0
        %779 = vmatmul.mubr.f32.gmra.mrb[0].mxu0 %v474
        %v780 = vpop.f32.mrb[0].mxu0
        %v781 = vadd.f32 0.0, %v780
        %v782 = vpop.f32.mrb[0].mxu0
        %783 = vdwg.mxu0
        %vm784 = vcmask 523264
        %v785 = vsel %vm784, %v546, -inf
        %v786 = vsel %vm784, %v551, -inf
        %v787 = vmax.f32 %v785, %v786
        %v788 = vsel %vm784, %v556, -inf
        %v789 = vmax.f32 %v787, %v788
        %v790 = vsel %vm784, %v561, -inf
        %v791 = vmax.f32 %v789, %v790
        %v792 = vrot.slane %v791, 4
        %v793 = vmax.f32 %v791, %v792
        %v794 = vrot.slane %v793, 2
        %v795 = vmax.f32 %v793, %v794
        %v796 = vrot.slane %v795, 1
        %v797 = vmax.f32 %v795, %v796
        %v798 = vsel %vm784, %v566, -inf
        %v799 = vsel %vm784, %v571, -inf
        %v800 = vmax.f32 %v798, %v799
        %v801 = vsel %vm784, %v576, -inf
        %v802 = vmax.f32 %v800, %v801
        %v803 = vsel %vm784, %v581, -inf
        %v804 = vmax.f32 %v802, %v803
        %v805 = vrot.slane %v804, 4
        %v806 = vmax.f32 %v804, %v805
        %v807 = vrot.slane %v806, 2
        %v808 = vmax.f32 %v806, %v807
        %v809 = vrot.slane %v808, 1
        %v810 = vmax.f32 %v808, %v809
        %v811 = vsel %vm784, %v586, -inf
        %v812 = vsel %vm784, %v591, -inf
        %v813 = vmax.f32 %v811, %v812
        %v814 = vsel %vm784, %v596, -inf
        %v815 = vmax.f32 %v813, %v814
        %v816 = vsel %vm784, %v601, -inf
        %v817 = vmax.f32 %v815, %v816
        %v818 = vrot.slane %v817, 4
        %v819 = vmax.f32 %v817, %v818
        %v820 = vrot.slane %v819, 2
        %v821 = vmax.f32 %v819, %v820
        %v822 = vrot.slane %v821, 1
        %v823 = vmax.f32 %v821, %v822
        %v824 = vsel %vm784, %v606, -inf
        %v825 = vsel %vm784, %v611, -inf
        %v826 = vmax.f32 %v824, %v825
        %v827 = vsel %vm784, %v616, -inf
        %v828 = vmax.f32 %v826, %v827
        %v829 = vsel %vm784, %v621, -inf
        %v830 = vmax.f32 %v828, %v829
        %v831 = vrot.slane %v830, 4
        %v832 = vmax.f32 %v830, %v831
        %v833 = vrot.slane %v832, 2
        %v834 = vmax.f32 %v832, %v833
        %v835 = vrot.slane %v834, 1
        %v836 = vmax.f32 %v834, %v835
        %v837 = vsub.f32 %v546, %v797
        %v838 = vsub.f32 %v551, %v797
        %v839 = vsub.f32 %v556, %v797
        %v840 = vsub.f32 %v561, %v797
        %v841 = vsub.f32 %v566, %v810
        %v842 = vsub.f32 %v571, %v810
        %v843 = vsub.f32 %v576, %v810
        %v844 = vsub.f32 %v581, %v810
        %v845 = vsub.f32 %v586, %v823
        %v846 = vsub.f32 %v591, %v823
        %v847 = vsub.f32 %v596, %v823
        %v848 = vsub.f32 %v601, %v823
        %v849 = vsub.f32 %v606, %v836
        %v850 = vsub.f32 %v611, %v836
        %v851 = vsub.f32 %v616, %v836
        %v852 = vsub.f32 %v621, %v836
        %v853 = vmul.f32 %v837, 1.442695
        %v854 = vpow.pop %v853
        %v855 = vmul.f32 %v838, 1.442695
        %v856 = vpow.pop %v855
        %v857 = vmul.f32 %v839, 1.442695
        %v858 = vpow.pop %v857
        %v859 = vmul.f32 %v840, 1.442695
        %v860 = vpow.pop %v859
        %v861 = vmul.f32 %v841, 1.442695
        %v862 = vpow.pop %v861
        %v863 = vmul.f32 %v842, 1.442695
        %v864 = vpow.pop %v863
        %v865 = vmul.f32 %v843, 1.442695
        %v866 = vpow.pop %v865
        %v867 = vmul.f32 %v844, 1.442695
        %v868 = vpow.pop %v867
        %v869 = vmul.f32 %v845, 1.442695
        %v870 = vpow.pop %v869
        %v871 = vmul.f32 %v846, 1.442695
        %v872 = vpow.pop %v871
        %v873 = vmul.f32 %v847, 1.442695
        %v874 = vpow.pop %v873
        %v875 = vmul.f32 %v848, 1.442695
        %v876 = vpow.pop %v875
        %v877 = vmul.f32 %v849, 1.442695
        %v878 = vpow.pop %v877
        %v879 = vmul.f32 %v850, 1.442695
        %v880 = vpow.pop %v879
        %v881 = vmul.f32 %v851, 1.442695
        %v882 = vpow.pop %v881
        %v883 = vmul.f32 %v852, 1.442695
        %v884 = vpow.pop %v883
        %v885 = vsel %vm784, %v854, 0.0
        %v886 = vsel %vm784, %v856, 0.0
        %v887 = vadd.f32 %v885, %v886
        %v888 = vsel %vm784, %v858, 0.0
        %v889 = vadd.f32 %v887, %v888
        %v890 = vsel %vm784, %v860, 0.0
        %v891 = vadd.f32 %v889, %v890
        %v892 = vrot.slane %v891, 4
        %v893 = vadd.f32 %v891, %v892
        %v894 = vrot.slane %v893, 2
        %v895 = vadd.f32 %v893, %v894
        %v896 = vrot.slane %v895, 1
        %v897 = vadd.f32 %v895, %v896
        %v898 = vsel %vm784, %v862, 0.0
        %v899 = vsel %vm784, %v864, 0.0
        %v900 = vadd.f32 %v898, %v899
        %v901 = vsel %vm784, %v866, 0.0
        %v902 = vadd.f32 %v900, %v901
        %v903 = vsel %vm784, %v868, 0.0
        %v904 = vadd.f32 %v902, %v903
        %v905 = vrot.slane %v904, 4
        %v906 = vadd.f32 %v904, %v905
        %v907 = vrot.slane %v906, 2
        %v908 = vadd.f32 %v906, %v907
        %v909 = vrot.slane %v908, 1
        %v910 = vadd.f32 %v908, %v909
        %v911 = vsel %vm784, %v870, 0.0
        %v912 = vsel %vm784, %v872, 0.0
        %v913 = vadd.f32 %v911, %v912
        %v914 = vsel %vm784, %v874, 0.0
        %v915 = vadd.f32 %v913, %v914
        %v916 = vsel %vm784, %v876, 0.0
        %v917 = vadd.f32 %v915, %v916
        %v918 = vrot.slane %v917, 4
        %v919 = vadd.f32 %v917, %v918
        %v920 = vrot.slane %v919, 2
        %v921 = vadd.f32 %v919, %v920
        %v922 = vrot.slane %v921, 1
        %v923 = vadd.f32 %v921, %v922
        %v924 = vsel %vm784, %v878, 0.0
        %v925 = vsel %vm784, %v880, 0.0
        %v926 = vadd.f32 %v924, %v925
        %v927 = vsel %vm784, %v882, 0.0
        %v928 = vadd.f32 %v926, %v927
        %v929 = vsel %vm784, %v884, 0.0
        %v930 = vadd.f32 %v928, %v929
        %v931 = vrot.slane %v930, 4
        %v932 = vadd.f32 %v930, %v931
        %v933 = vrot.slane %v932, 2
        %v934 = vadd.f32 %v932, %v933
        %v935 = vrot.slane %v934, 1
        %v936 = vadd.f32 %v934, %v935
        %v937 = vrcp.pop %v897
        %v938 = vrcp.pop %v910
        %v939 = vrcp.pop %v923
        %v940 = vrcp.pop %v936
        %v941 = vmul.f32 %v854, %v937
        %v942 = vmul.f32 %v856, %v937
        %v943 = vmul.f32 %v858, %v937
        %v944 = vmul.f32 %v860, %v937
        %v945 = vmul.f32 %v862, %v938
        %v946 = vmul.f32 %v864, %v938
        %v947 = vmul.f32 %v866, %v938
        %v948 = vmul.f32 %v868, %v938
        %v949 = vmul.f32 %v870, %v939
        %v950 = vmul.f32 %v872, %v939
        %v951 = vmul.f32 %v874, %v939
        %v952 = vmul.f32 %v876, %v939
        %v953 = vmul.f32 %v878, %v940
        %v954 = vmul.f32 %v880, %v940
        %v955 = vmul.f32 %v882, %v940
        %v956 = vmul.f32 %v884, %v940
        %v957 = vsel %vm784, %v626, -inf
        %958 = vmax.xlane.f32.xlu0 %v957
        %v959 = vpop.xlane.xlu0 %958
        %v960 = vsel %vm784, %v631, -inf
        %961 = vmax.xlane.f32.xlu0 %v960
        %v962 = vpop.xlane.xlu0 %961
        %v963 = vsel %vm784, %v636, -inf
        %964 = vmax.xlane.f32.xlu0 %v963
        %v965 = vpop.xlane.xlu0 %964
        %v966 = vsel %vm784, %v641, -inf
        %967 = vmax.xlane.f32.xlu0 %v966
        %v968 = vpop.xlane.xlu0 %967
        %v969 = vsel %vm784, %v646, -inf
        %970 = vmax.xlane.f32.xlu0 %v969
        %v971 = vpop.xlane.xlu0 %970
        %v972 = vsel %vm784, %v651, -inf
        %973 = vmax.xlane.f32.xlu0 %v972
        %v974 = vpop.xlane.xlu0 %973
        %v975 = vsel %vm784, %v656, -inf
        %976 = vmax.xlane.f32.xlu0 %v975
        %v977 = vpop.xlane.xlu0 %976
        %v978 = vsel %vm784, %v661, -inf
        %979 = vmax.xlane.f32.xlu0 %v978
        %v980 = vpop.xlane.xlu0 %979
        %v981 = vsel %vm784, %v666, -inf
        %982 = vmax.xlane.f32.xlu0 %v981
        %v983 = vpop.xlane.xlu0 %982
        %v984 = vsel %vm784, %v671, -inf
        %985 = vmax.xlane.f32.xlu0 %v984
        %v986 = vpop.xlane.xlu0 %985
        %v987 = vsel %vm784, %v676, -inf
        %988 = vmax.xlane.f32.xlu0 %v987
        %v989 = vpop.xlane.xlu0 %988
        %v990 = vsel %vm784, %v681, -inf
        %991 = vmax.xlane.f32.xlu0 %v990
        %v992 = vpop.xlane.xlu0 %991
        %v993 = vsel %vm784, %v686, -inf
        %994 = vmax.xlane.f32.xlu0 %v993
        %v995 = vpop.xlane.xlu0 %994
        %v996 = vsel %vm784, %v691, -inf
        %997 = vmax.xlane.f32.xlu0 %v996
        %v998 = vpop.xlane.xlu0 %997
        %v999 = vsel %vm784, %v696, -inf
        %1000 = vmax.xlane.f32.xlu0 %v999
        %v1001 = vpop.xlane.xlu0 %1000
        %v1002 = vsel %vm784, %v701, -inf
        %1003 = vmax.xlane.f32.xlu0 %v1002
        %v1004 = vpop.xlane.xlu0 %1003
        %v1005 = vsub.f32 %v626, %v959
        %v1006 = vsub.f32 %v631, %v962
        %v1007 = vsub.f32 %v636, %v965
        %v1008 = vsub.f32 %v641, %v968
        %v1009 = vsub.f32 %v646, %v971
        %v1010 = vsub.f32 %v651, %v974
        %v1011 = vsub.f32 %v656, %v977
        %v1012 = vsub.f32 %v661, %v980
        %v1013 = vsub.f32 %v666, %v983
        %v1014 = vsub.f32 %v671, %v986
        %v1015 = vsub.f32 %v676, %v989
        %v1016 = vsub.f32 %v681, %v992
        %v1017 = vsub.f32 %v686, %v995
        %v1018 = vsub.f32 %v691, %v998
        %v1019 = vsub.f32 %v696, %v1001
        %v1020 = vsub.f32 %v701, %v1004
        %v1021 = vmul.f32 %v1005, 1.442695
        %v1022 = vpow.pop %v1021
        %v1023 = vmul.f32 %v1006, 1.442695
        %v1024 = vpow.pop %v1023
        %v1025 = vmul.f32 %v1007, 1.442695
        %v1026 = vpow.pop %v1025
        %v1027 = vmul.f32 %v1008, 1.442695
        %v1028 = vpow.pop %v1027
        %v1029 = vmul.f32 %v1009, 1.442695
        %v1030 = vpow.pop %v1029
        %v1031 = vmul.f32 %v1010, 1.442695
        %v1032 = vpow.pop %v1031
        %v1033 = vmul.f32 %v1011, 1.442695
        %v1034 = vpow.pop %v1033
        %v1035 = vmul.f32 %v1012, 1.442695
        %v1036 = vpow.pop %v1035
        %v1037 = vmul.f32 %v1013, 1.442695
        %v1038 = vpow.pop %v1037
        %v1039 = vmul.f32 %v1014, 1.442695
        %v1040 = vpow.pop %v1039
        %v1041 = vmul.f32 %v1015, 1.442695
        %v1042 = vpow.pop %v1041
        %v1043 = vmul.f32 %v1016, 1.442695
        %v1044 = vpow.pop %v1043
        %v1045 = vmul.f32 %v1017, 1.442695
        %v1046 = vpow.pop %v1045
        %v1047 = vmul.f32 %v1018, 1.442695
        %v1048 = vpow.pop %v1047
        %v1049 = vmul.f32 %v1019, 1.442695
        %v1050 = vpow.pop %v1049
        %v1051 = vmul.f32 %v1020, 1.442695
        %v1052 = vpow.pop %v1051
        %v1053 = vsel %vm784, %v1022, 0.0
        %1054 = vadd.xlane.f32.xlu0 %v1053
        %v1055 = vpop.xlane.xlu0 %1054
        %v1056 = vsel %vm784, %v1024, 0.0
        %1057 = vadd.xlane.f32.xlu0 %v1056
        %v1058 = vpop.xlane.xlu0 %1057
        %v1059 = vsel %vm784, %v1026, 0.0
        %1060 = vadd.xlane.f32.xlu0 %v1059
        %v1061 = vpop.xlane.xlu0 %1060
        %v1062 = vsel %vm784, %v1028, 0.0
        %1063 = vadd.xlane.f32.xlu0 %v1062
        %v1064 = vpop.xlane.xlu0 %1063
        %v1065 = vsel %vm784, %v1030, 0.0
        %1066 = vadd.xlane.f32.xlu0 %v1065
        %v1067 = vpop.xlane.xlu0 %1066
        %v1068 = vsel %vm784, %v1032, 0.0
        %1069 = vadd.xlane.f32.xlu0 %v1068
        %v1070 = vpop.xlane.xlu0 %1069
        %v1071 = vsel %vm784, %v1034, 0.0
        %1072 = vadd.xlane.f32.xlu0 %v1071
        %v1073 = vpop.xlane.xlu0 %1072
        %v1074 = vsel %vm784, %v1036, 0.0
        %1075 = vadd.xlane.f32.xlu0 %v1074
        %v1076 = vpop.xlane.xlu0 %1075
        %v1077 = vsel %vm784, %v1038, 0.0
        %1078 = vadd.xlane.f32.xlu0 %v1077
        %v1079 = vpop.xlane.xlu0 %1078
        %v1080 = vsel %vm784, %v1040, 0.0
        %1081 = vadd.xlane.f32.xlu0 %v1080
        %v1082 = vpop.xlane.xlu0 %1081
        %v1083 = vsel %vm784, %v1042, 0.0
        %1084 = vadd.xlane.f32.xlu0 %v1083
        %v1085 = vpop.xlane.xlu0 %1084
        %v1086 = vsel %vm784, %v1044, 0.0
        %1087 = vadd.xlane.f32.xlu0 %v1086
        %v1088 = vpop.xlane.xlu0 %1087
        %v1089 = vsel %vm784, %v1046, 0.0
        %1090 = vadd.xlane.f32.xlu0 %v1089
        %v1091 = vpop.xlane.xlu0 %1090
        %v1092 = vsel %vm784, %v1048, 0.0
        %1093 = vadd.xlane.f32.xlu0 %v1092
        %v1094 = vpop.xlane.xlu0 %1093
        %v1095 = vsel %vm784, %v1050, 0.0
        %1096 = vadd.xlane.f32.xlu0 %v1095
        %v1097 = vpop.xlane.xlu0 %1096
        %v1098 = vsel %vm784, %v1052, 0.0
        %1099 = vadd.xlane.f32.xlu0 %v1098
        %v1100 = vpop.xlane.xlu0 %1099
        %v1101 = vrcp.pop %v1055
        %v1102 = vrcp.pop %v1058
        %v1103 = vrcp.pop %v1061
        %v1104 = vrcp.pop %v1064
        %v1105 = vrcp.pop %v1067
        %v1106 = vrcp.pop %v1070
        %v1107 = vrcp.pop %v1073
        %v1108 = vrcp.pop %v1076
        %v1109 = vrcp.pop %v1079
        %v1110 = vrcp.pop %v1082
        %v1111 = vrcp.pop %v1085
        %v1112 = vrcp.pop %v1088
        %v1113 = vrcp.pop %v1091
        %v1114 = vrcp.pop %v1094
        %v1115 = vrcp.pop %v1097
        %v1116 = vrcp.pop %v1100
        %v1117 = vmul.f32 %v1022, %v1101
        %v1118 = vmul.f32 %v1024, %v1102
        %v1119 = vmul.f32 %v1026, %v1103
        %v1120 = vmul.f32 %v1028, %v1104
        %v1121 = vmul.f32 %v1030, %v1105
        %v1122 = vmul.f32 %v1032, %v1106
        %v1123 = vmul.f32 %v1034, %v1107
        %v1124 = vmul.f32 %v1036, %v1108
        %v1125 = vmul.f32 %v1038, %v1109
        %v1126 = vmul.f32 %v1040, %v1110
        %v1127 = vmul.f32 %v1042, %v1111
        %v1128 = vmul.f32 %v1044, %v1112
        %v1129 = vmul.f32 %v1046, %v1113
        %v1130 = vmul.f32 %v1048, %v1114
        %v1131 = vmul.f32 %v1050, %v1115
        %v1132 = vmul.f32 %v1052, %v1116
        %v1134 = vsel %vm784, %v706, 0
        %v1137 = vsel %vm784, %v711, 0
        %v1140 = vsel %vm784, %v716, 0
        %v1143 = vsel %vm784, %v721, 0
        %v1146 = vsel %vm784, %v726, 0
        %v1149 = vsel %vm784, %v731, 0
        %v1152 = vsel %vm784, %v736, 0
        %v1155 = vsel %vm784, %v741, 0
        %v1158 = vsel %vm784, %v746, 0
        %v1161 = vsel %vm784, %v751, 0
        %v1164 = vsel %vm784, %v756, 0
        %v1167 = vsel %vm784, %v761, 0
        %v1170 = vsel %vm784, %v766, 0
        %v1173 = vsel %vm784, %v771, 0
        %v1176 = vsel %vm784, %v776, 0
        %v1179 = vsel %vm784, %v781, 0
        %v1182 = vsel %vm784, %v1117, 0
        %v1185 = vsel %vm784, %v1118, 0
        %v1188 = vsel %vm784, %v1119, 0
        %v1191 = vsel %vm784, %v1120, 0
        %v1194 = vsel %vm784, %v1121, 0
        %v1197 = vsel %vm784, %v1122, 0
        %v1200 = vsel %vm784, %v1123, 0
        %v1203 = vsel %vm784, %v1124, 0
        %v1206 = vsel %vm784, %v1125, 0
        %v1209 = vsel %vm784, %v1126, 0
        %v1212 = vsel %vm784, %v1127, 0
        %v1215 = vsel %vm784, %v1128, 0
        %v1218 = vsel %vm784, %v1129, 0
        %v1221 = vsel %vm784, %v1130, 0
        %v1224 = vsel %vm784, %v1131, 0
        %v1227 = vsel %vm784, %v1132, 0
        %1229 = vmatprep.subr.mxu0 0.0
        %1230 = vmatpush1.xpose.msra.mxu0 %v1182
        %1231 = vmatprep.subr.mxu0 0.0
        %1232 = vmatpush1.xpose.msra.mxu0 %v1185
        %1233 = vmatprep.subr.mxu0 0.0
        %1234 = vmatpush1.xpose.msra.mxu0 %v1188
        %1235 = vmatprep.subr.mxu0 0.0
        %1236 = vmatpush1.xpose.msra.mxu0 %v1191
        %1237 = vmatprep.subr.mxu0 0.0
        %1238 = vmatpush1.xpose.msra.mxu0 %v1194
        %1239 = vmatprep.subr.mxu0 0.0
        %1240 = vmatpush1.xpose.msra.mxu0 %v1197
        %1241 = vmatprep.subr.mxu0 0.0
        %1242 = vmatpush1.xpose.msra.mxu0 %v1200
        %1243 = vmatprep.subr.mxu0 0.0
        %1244 = vmatpush1.xpose.msra.mxu0 %v1203
        %1245 = vmatprep.subr.mxu0 0.0
        %1246 = vmatpush1.xpose.msra.mxu0 %v1206
        %1247 = vmatprep.subr.mxu0 0.0
        %1248 = vmatpush1.xpose.msra.mxu0 %v1209
        %1249 = vmatprep.subr.mxu0 0.0
        %1250 = vmatpush1.xpose.msra.mxu0 %v1212
        %1251 = vmatprep.subr.mxu0 0.0
        %1252 = vmatpush1.xpose.msra.mxu0 %v1215
        %1253 = vmatprep.subr.mxu0 0.0
        %1254 = vmatpush1.xpose.msra.mxu0 %v1218
        %1255 = vmatprep.subr.mxu0 0.0
        %1256 = vmatpush1.xpose.msra.mxu0 %v1221
        %1257 = vmatprep.subr.mxu0 0.0
        %1258 = vmatpush1.xpose.msra.mxu0 %v1224
        %1259 = vmatprep.subr.mxu0 0.0
        %1260 = vmatpush1.xpose.msra.mxu0 %v1227
        %1261 = vmatprep.subr.mxu0 0.0
        %1262 = vmatpush1.xpose.msra.mxu0 0.0
        %1263 = vmatprep.subr.mxu0 0.0
        %1264 = vmatpush1.xpose.msra.mxu0 0.0
        %1265 = vmatprep.subr.mxu0 0.0
        %1266 = vmatpush1.xpose.msra.mxu0 0.0
        %1267 = vmatprep.subr.mxu0 0.0
        %1268 = vmatpush1.xpose.msra.mxu0 0.0
        %1269 = vmatprep.subr.mxu0 0.0
        %1270 = vmatpush1.xpose.msra.mxu0 0.0
        %1271 = vmatprep.subr.mxu0 0.0
        %1272 = vmatpush1.xpose.msra.mxu0 0.0
        %1273 = vmatprep.subr.mxu0 0.0
        %1274 = vmatpush1.xpose.msra.mxu0 0.0
        %1275 = vmatprep.subr.mxu0 0.0
        %1276 = vmatpush1.xpose.msra.mxu0 0.0
        %1277 = vmatprep.subr.mxu0 0.0
        %1278 = vmatpush1.xpose.msra.mxu0 0.0
        %1279 = vmatprep.subr.mxu0 0.0
        %1280 = vmatpush1.xpose.msra.mxu0 0.0
        %1281 = vmatprep.subr.mxu0 0.0
        %1282 = vmatpush1.xpose.msra.mxu0 0.0
        %1283 = vmatprep.subr.mxu0 0.0
        %1284 = vmatpush1.xpose.msra.mxu0 0.0
        %1285 = vmatprep.subr.mxu0 0.0
        %1286 = vmatpush1.xpose.msra.mxu0 0.0
        %1287 = vmatprep.subr.mxu0 0.0
        %1288 = vmatpush1.xpose.msra.mxu0 0.0
        %1289 = vmatprep.subr.mxu0 0.0
        %1290 = vmatpush1.xpose.msra.mxu0 0.0
        %1291 = vmatprep.subr.mxu0 0.0
        %1292 = vmatpush1.xpose.msra.mxu0 0.0
        %1293 = vmatprep.mubr.f32.mxu0 0.0
        %1294 = vmatmul.mubr.f32.gmra.mrb[0].mxu0 %v1134
        %v1295 = vpop.f32.mrb[0].mxu0
        %v1296 = vadd.f32 0.0, %v1295
        %v1297 = vpop.f32.mrb[0].mxu0
        %1298 = vmatprep.mubr.f32.mxu0 0.0
        %1299 = vmatmul.mubr.f32.gmra.mrb[0].mxu0 %v1137
        %v1300 = vpop.f32.mrb[0].mxu0
        %v1301 = vadd.f32 0.0, %v1300
        %v1302 = vpop.f32.mrb[0].mxu0
        %1303 = vmatprep.mubr.f32.mxu0 0.0
        %1304 = vmatmul.mubr.f32.gmra.mrb[0].mxu0 %v1140
        %v1305 = vpop.f32.mrb[0].mxu0
        %v1306 = vadd.f32 0.0, %v1305
        %v1307 = vpop.f32.mrb[0].mxu0
        %1308 = vmatprep.mubr.f32.mxu0 0.0
        %1309 = vmatmul.mubr.f32.gmra.mrb[0].mxu0 %v1143
        %v1310 = vpop.f32.mrb[0].mxu0
        %v1311 = vadd.f32 0.0, %v1310
        %v1312 = vpop.f32.mrb[0].mxu0
        %1313 = vmatprep.mubr.f32.mxu0 0.0
        %1314 = vmatmul.mubr.f32.gmra.mrb[0].mxu0 %v1146
        %v1315 = vpop.f32.mrb[0].mxu0
        %v1316 = vadd.f32 0.0, %v1315
        %v1317 = vpop.f32.mrb[0].mxu0
        %1318 = vmatprep.mubr.f32.mxu0 0.0
        %1319 = vmatmul.mubr.f32.gmra.mrb[0].mxu0 %v1149
        %v1320 = vpop.f32.mrb[0].mxu0
        %v1321 = vadd.f32 0.0, %v1320
        %v1322 = vpop.f32.mrb[0].mxu0
        %1323 = vmatprep.mubr.f32.mxu0 0.0
        %1324 = vmatmul.mubr.f32.gmra.mrb[0].mxu0 %v1152
        %v1325 = vpop.f32.mrb[0].mxu0
        %v1326 = vadd.f32 0.0, %v1325
        %v1327 = vpop.f32.mrb[0].mxu0
        %1328 = vmatprep.mubr.f32.mxu0 0.0
        %1329 = vmatmul.mubr.f32.gmra.mrb[0].mxu0 %v1155
        %v1330 = vpop.f32.mrb[0].mxu0
        %v1331 = vadd.f32 0.0, %v1330
        %v1332 = vpop.f32.mrb[0].mxu0
        %1333 = vmatprep.mubr.f32.mxu0 0.0
        %1334 = vmatmul.mubr.f32.gmra.mrb[0].mxu0 %v1158
        %v1335 = vpop.f32.mrb[0].mxu0
        %v1336 = vadd.f32 0.0, %v1335
        %v1337 = vpop.f32.mrb[0].mxu0
        %1338 = vmatprep.mubr.f32.mxu0 0.0
        %1339 = vmatmul.mubr.f32.gmra.mrb[0].mxu0 %v1161
        %v1340 = vpop.f32.mrb[0].mxu0
        %v1341 = vadd.f32 0.0, %v1340
        %v1342 = vpop.f32.mrb[0].mxu0
        %1343 = vmatprep.mubr.f32.mxu0 0.0
        %1344 = vmatmul.mubr.f32.gmra.mrb[0].mxu0 %v1164
        %v1345 = vpop.f32.mrb[0].mxu0
        %v1346 = vadd.f32 0.0, %v1345
        %v1347 = vpop.f32.mrb[0].mxu0
        %1348 = vmatprep.mubr.f32.mxu0 0.0
        %1349 = vmatmul.mubr.f32.gmra.mrb[0].mxu0 %v1167
        %v1350 = vpop.f32.mrb[0].mxu0
        %v1351 = vadd.f32 0.0, %v1350
        %v1352 = vpop.f32.mrb[0].mxu0
        %1353 = vmatprep.mubr.f32.mxu0 0.0
        %1354 = vmatmul.mubr.f32.gmra.mrb[0].mxu0 %v1170
        %v1355 = vpop.f32.mrb[0].mxu0
        %v1356 = vadd.f32 0.0, %v1355
        %v1357 = vpop.f32.mrb[0].mxu0
        %1358 = vmatprep.mubr.f32.mxu0 0.0
        %1359 = vmatmul.mubr.f32.gmra.mrb[0].mxu0 %v1173
        %v1360 = vpop.f32.mrb[0].mxu0
        %v1361 = vadd.f32 0.0, %v1360
        %v1362 = vpop.f32.mrb[0].mxu0
        %1363 = vmatprep.mubr.f32.mxu0 0.0
        %1364 = vmatmul.mubr.f32.gmra.mrb[0].mxu0 %v1176
        %v1365 = vpop.f32.mrb[0].mxu0
        %v1366 = vadd.f32 0.0, %v1365
        %v1367 = vpop.f32.mrb[0].mxu0
        %1368 = vmatprep.mubr.f32.mxu0 0.0
        %1369 = vmatmul.mubr.f32.gmra.mrb[0].mxu0 %v1179
        %v1370 = vpop.f32.mrb[0].mxu0
        %v1371 = vadd.f32 0.0, %v1370
        %v1372 = vpop.f32.mrb[0].mxu0
        %1373 = vdwg.mxu0
        %v1374 = vmul.f32 %v1296, %v298
        %v1375 = vmul.f32 %v1301, %v299
        %v1376 = vmul.f32 %v1306, %v300
        %v1377 = vmul.f32 %v1311, %v301
        %v1378 = vmul.f32 %v1316, %v302
        %v1379 = vmul.f32 %v1321, %v303
        %v1380 = vmul.f32 %v1326, %v304
        %v1381 = vmul.f32 %v1331, %v305
        %v1382 = vmul.f32 %v1336, %v306
        %v1383 = vmul.f32 %v1341, %v307
        %v1384 = vmul.f32 %v1346, %v308
        %v1385 = vmul.f32 %v1351, %v309
        %v1386 = vmul.f32 %v1356, %v310
        %v1387 = vmul.f32 %v1361, %v311
        %v1388 = vmul.f32 %v1366, %v312
        %v1389 = vmul.f32 %v1371, %v313
        %1390 = vmatprep.subr.mxu0 0.0
        %1391 = vmatpush1.msra.mxu0 %v941
        %1392 = vmatprep.subr.mxu0 0.0
        %1393 = vmatpush1.msra.mxu0 %v942
        %1394 = vmatprep.subr.mxu0 0.0
        %1395 = vmatpush1.msra.mxu0 %v943
        %1396 = vmatprep.subr.mxu0 0.0
        %1397 = vmatpush1.msra.mxu0 %v944
        %1398 = vmatprep.subr.mxu0 0.0
        %1399 = vmatpush1.msra.mxu0 %v945
        %1400 = vmatprep.subr.mxu0 0.0
        %1401 = vmatpush1.msra.mxu0 %v946
        %1402 = vmatprep.subr.mxu0 0.0
        %1403 = vmatpush1.msra.mxu0 %v947
        %1404 = vmatprep.subr.mxu0 0.0
        %1405 = vmatpush1.msra.mxu0 %v948
        %1406 = vmatprep.subr.mxu0 0.0
        %1407 = vmatpush1.msra.mxu0 %v949
        %1408 = vmatprep.subr.mxu0 0.0
        %1409 = vmatpush1.msra.mxu0 %v950
        %1410 = vmatprep.subr.mxu0 0.0
        %1411 = vmatpush1.msra.mxu0 %v951
        %1412 = vmatprep.subr.mxu0 0.0
        %1413 = vmatpush1.msra.mxu0 %v952
        %1414 = vmatprep.subr.mxu0 0.0
        %1415 = vmatpush1.msra.mxu0 %v953
        %1416 = vmatprep.subr.mxu0 0.0
        %1417 = vmatpush1.msra.mxu0 %v954
        %1418 = vmatprep.subr.mxu0 0.0
        %1419 = vmatpush1.msra.mxu0 %v955
        %1420 = vmatprep.subr.mxu0 0.0
        %1421 = vmatpush1.msra.mxu0 %v956
        %1422 = vmatprep.subr.mxu0 0.0
        %1423 = vmatpush1.msra.mxu0 0.0
        %1424 = vmatprep.subr.mxu0 0.0
        %1425 = vmatpush1.msra.mxu0 0.0
        %1426 = vmatprep.subr.mxu0 0.0
        %1427 = vmatpush1.msra.mxu0 0.0
        %1428 = vmatprep.subr.mxu0 0.0
        %1429 = vmatpush1.msra.mxu0 0.0
        %1430 = vmatprep.subr.mxu0 0.0
        %1431 = vmatpush1.msra.mxu0 0.0
        %1432 = vmatprep.subr.mxu0 0.0
        %1433 = vmatpush1.msra.mxu0 0.0
        %1434 = vmatprep.subr.mxu0 0.0
        %1435 = vmatpush1.msra.mxu0 0.0
        %1436 = vmatprep.subr.mxu0 0.0
        %1437 = vmatpush1.msra.mxu0 0.0
        %1438 = vmatprep.subr.mxu0 0.0
        %1439 = vmatpush1.msra.mxu0 0.0
        %1440 = vmatprep.subr.mxu0 0.0
        %1441 = vmatpush1.msra.mxu0 0.0
        %1442 = vmatprep.subr.mxu0 0.0
        %1443 = vmatpush1.msra.mxu0 0.0
        %1444 = vmatprep.subr.mxu0 0.0
        %1445 = vmatpush1.msra.mxu0 0.0
        %1446 = vmatprep.subr.mxu0 0.0
        %1447 = vmatpush1.msra.mxu0 0.0
        %1448 = vmatprep.subr.mxu0 0.0
        %1449 = vmatpush1.msra.mxu0 0.0
        %1450 = vmatprep.subr.mxu0 0.0
        %1451 = vmatpush1.msra.mxu0 0.0
        %1452 = vmatprep.subr.mxu0 0.0
        %1453 = vmatpush1.msra.mxu0 0.0
        %1454 = vmatprep.mubr.f32.mxu0 0.0
        %1455 = vmatmul.mubr.f32.gmra.mrb[0].mxu0 %v1374
        %v1456 = vpop.f32.mrb[0].mxu0
        %v1457 = vadd.f32 0.0, %v1456
        %v1458 = vpop.f32.mrb[0].mxu0
        %1459 = vmatprep.mubr.f32.mxu0 0.0
        %1460 = vmatmul.mubr.f32.gmra.mrb[0].mxu0 %v1375
        %v1461 = vpop.f32.mrb[0].mxu0
        %v1462 = vadd.f32 0.0, %v1461
        %v1463 = vpop.f32.mrb[0].mxu0
        %1464 = vmatprep.mubr.f32.mxu0 0.0
        %1465 = vmatmul.mubr.f32.gmra.mrb[0].mxu0 %v1376
        %v1466 = vpop.f32.mrb[0].mxu0
        %v1467 = vadd.f32 0.0, %v1466
        %v1468 = vpop.f32.mrb[0].mxu0
        %1469 = vmatprep.mubr.f32.mxu0 0.0
        %1470 = vmatmul.mubr.f32.gmra.mrb[0].mxu0 %v1377
        %v1471 = vpop.f32.mrb[0].mxu0
        %v1472 = vadd.f32 0.0, %v1471
        %v1473 = vpop.f32.mrb[0].mxu0
        %1474 = vmatprep.mubr.f32.mxu0 0.0
        %1475 = vmatmul.mubr.f32.gmra.mrb[0].mxu0 %v1378
        %v1476 = vpop.f32.mrb[0].mxu0
        %v1477 = vadd.f32 0.0, %v1476
        %v1478 = vpop.f32.mrb[0].mxu0
        %1479 = vmatprep.mubr.f32.mxu0 0.0
        %1480 = vmatmul.mubr.f32.gmra.mrb[0].mxu0 %v1379
        %v1481 = vpop.f32.mrb[0].mxu0
        %v1482 = vadd.f32 0.0, %v1481
        %v1483 = vpop.f32.mrb[0].mxu0
        %1484 = vmatprep.mubr.f32.mxu0 0.0
        %1485 = vmatmul.mubr.f32.gmra.mrb[0].mxu0 %v1380
        %v1486 = vpop.f32.mrb[0].mxu0
        %v1487 = vadd.f32 0.0, %v1486
        %v1488 = vpop.f32.mrb[0].mxu0
        %1489 = vmatprep.mubr.f32.mxu0 0.0
        %1490 = vmatmul.mubr.f32.gmra.mrb[0].mxu0 %v1381
        %v1491 = vpop.f32.mrb[0].mxu0
        %v1492 = vadd.f32 0.0, %v1491
        %v1493 = vpop.f32.mrb[0].mxu0
        %1494 = vmatprep.mubr.f32.mxu0 0.0
        %1495 = vmatmul.mubr.f32.gmra.mrb[0].mxu0 %v1382
        %v1496 = vpop.f32.mrb[0].mxu0
        %v1497 = vadd.f32 0.0, %v1496
        %v1498 = vpop.f32.mrb[0].mxu0
        %1499 = vmatprep.mubr.f32.mxu0 0.0
        %1500 = vmatmul.mubr.f32.gmra.mrb[0].mxu0 %v1383
        %v1501 = vpop.f32.mrb[0].mxu0
        %v1502 = vadd.f32 0.0, %v1501
        %v1503 = vpop.f32.mrb[0].mxu0
        %1504 = vmatprep.mubr.f32.mxu0 0.0
        %1505 = vmatmul.mubr.f32.gmra.mrb[0].mxu0 %v1384
        %v1506 = vpop.f32.mrb[0].mxu0
        %v1507 = vadd.f32 0.0, %v1506
        %v1508 = vpop.f32.mrb[0].mxu0
        %1509 = vmatprep.mubr.f32.mxu0 0.0
        %1510 = vmatmul.mubr.f32.gmra.mrb[0].mxu0 %v1385
        %v1511 = vpop.f32.mrb[0].mxu0
        %v1512 = vadd.f32 0.0, %v1511
        %v1513 = vpop.f32.mrb[0].mxu0
        %1514 = vmatprep.mubr.f32.mxu0 0.0
        %1515 = vmatmul.mubr.f32.gmra.mrb[0].mxu0 %v1386
        %v1516 = vpop.f32.mrb[0].mxu0
        %v1517 = vadd.f32 0.0, %v1516
        %v1518 = vpop.f32.mrb[0].mxu0
        %1519 = vmatprep.mubr.f32.mxu0 0.0
        %1520 = vmatmul.mubr.f32.gmra.mrb[0].mxu0 %v1387
        %v1521 = vpop.f32.mrb[0].mxu0
        %v1522 = vadd.f32 0.0, %v1521
        %v1523 = vpop.f32.mrb[0].mxu0
        %1524 = vmatprep.mubr.f32.mxu0 0.0
        %1525 = vmatmul.mubr.f32.gmra.mrb[0].mxu0 %v1388
        %v1526 = vpop.f32.mrb[0].mxu0
        %v1527 = vadd.f32 0.0, %v1526
        %v1528 = vpop.f32.mrb[0].mxu0
        %1529 = vmatprep.mubr.f32.mxu0 0.0
        %1530 = vmatmul.mubr.f32.gmra.mrb[0].mxu0 %v1389
        %v1531 = vpop.f32.mrb[0].mxu0
        %v1532 = vadd.f32 0.0, %v1531
        %v1533 = vpop.f32.mrb[0].mxu0
        %1534 = vdwg.mxu0
        %1536 = vset.pattern.permute.xlu0 0
        %1537 = vperm.xlu0 %1536, %v297
        %v1538 = vpop.permute.xlu0 %1537
        %1540 = vmatprep.subr.mxu0 0.0
        %1541 = vmatpush1.msra.mxu0 %v1457
        %1542 = vmatprep.subr.mxu0 0.0
        %1543 = vmatpush1.msra.mxu0 %v1462
        %1544 = vmatprep.subr.mxu0 0.0
        %1545 = vmatpush1.msra.mxu0 %v1467
        %1546 = vmatprep.subr.mxu0 0.0
        %1547 = vmatpush1.msra.mxu0 %v1472
        %1548 = vmatprep.subr.mxu0 0.0
        %1549 = vmatpush1.msra.mxu0 %v1477
        %1550 = vmatprep.subr.mxu0 0.0
        %1551 = vmatpush1.msra.mxu0 %v1482
        %1552 = vmatprep.subr.mxu0 0.0
        %1553 = vmatpush1.msra.mxu0 %v1487
        %1554 = vmatprep.subr.mxu0 0.0
        %1555 = vmatpush1.msra.mxu0 %v1492
        %1556 = vmatprep.subr.mxu0 0.0
        %1557 = vmatpush1.msra.mxu0 %v1497
        %1558 = vmatprep.subr.mxu0 0.0
        %1559 = vmatpush1.msra.mxu0 %v1502
        %1560 = vmatprep.subr.mxu0 0.0
        %1561 = vmatpush1.msra.mxu0 %v1507
        %1562 = vmatprep.subr.mxu0 0.0
        %1563 = vmatpush1.msra.mxu0 %v1512
        %1564 = vmatprep.subr.mxu0 0.0
        %1565 = vmatpush1.msra.mxu0 %v1517
        %1566 = vmatprep.subr.mxu0 0.0
        %1567 = vmatpush1.msra.mxu0 %v1522
        %1568 = vmatprep.subr.mxu0 0.0
        %1569 = vmatpush1.msra.mxu0 %v1527
        %1570 = vmatprep.subr.mxu0 0.0
        %1571 = vmatpush1.msra.mxu0 %v1532
        %1572 = vmatprep.subr.mxu0 0.0
        %1573 = vmatpush1.msra.mxu0 0.0
        %1574 = vmatprep.subr.mxu0 0.0
        %1575 = vmatpush1.msra.mxu0 0.0
        %1576 = vmatprep.subr.mxu0 0.0
        %1577 = vmatpush1.msra.mxu0 0.0
        %1578 = vmatprep.subr.mxu0 0.0
        %1579 = vmatpush1.msra.mxu0 0.0
        %1580 = vmatprep.subr.mxu0 0.0
        %1581 = vmatpush1.msra.mxu0 0.0
        %1582 = vmatprep.subr.mxu0 0.0
        %1583 = vmatpush1.msra.mxu0 0.0
        %1584 = vmatprep.subr.mxu0 0.0
        %1585 = vmatpush1.msra.mxu0 0.0
        %1586 = vmatprep.subr.mxu0 0.0
        %1587 = vmatpush1.msra.mxu0 0.0
        %1588 = vmatprep.subr.mxu0 0.0
        %1589 = vmatpush1.msra.mxu0 0.0
        %1590 = vmatprep.subr.mxu0 0.0
        %1591 = vmatpush1.msra.mxu0 0.0
        %1592 = vmatprep.subr.mxu0 0.0
        %1593 = vmatpush1.msra.mxu0 0.0
        %1594 = vmatprep.subr.mxu0 0.0
        %1595 = vmatpush1.msra.mxu0 0.0
        %1596 = vmatprep.subr.mxu0 0.0
        %1597 = vmatpush1.msra.mxu0 0.0
        %1598 = vmatprep.subr.mxu0 0.0
        %1599 = vmatpush1.msra.mxu0 0.0
        %1600 = vmatprep.subr.mxu0 0.0
        %1601 = vmatpush1.msra.mxu0 0.0
        %1602 = vmatprep.subr.mxu0 0.0
        %1603 = vmatpush1.msra.mxu0 0.0
        %1604 = vmatprep.mubr.f32.mxu0 0.0
        %1605 = vmatmul.mubr.f32.gmra.mrb[0].mxu0 %v296
        %v1606 = vpop.f32.mrb[0].mxu0
        %v1607 = vadd.f32 %v1538, %v1606
        %v1608 = vpop.f32.mrb[0].mxu0
        %1609 = vdwg.mxu0
        %v1612 = vunpack.c.l.s4 1966171168
        %v1613 = vunpack.c.0.s8 %v1612
        %v1614 = vlaneseq
        %v1615 = vshrl.u32 %v1614, 7
        %v1616 = vsub.s32 %v1613, %v1615
        %v1617 = vrot.slane %v1607, %v1616
        %v1618 = vcombine.high %v1617, %v1617
        %v1620 = vunpack.c.l.s4 1966171168
        %v1621 = vunpack.c.0.s8 %v1620
        %v1622 = vlaneseq
        %v1623 = vshrl.u32 %v1622, 7
        %v1624 = vsub.s32 %v1621, %v1623
        %v1625 = vrot.slane %v1617, %v1624
        %v1627 = vunpack.c.l.s4 1966171168
        %v1628 = vunpack.c.0.s8 %v1627
        %v1629 = vlaneseq
        %v1630 = vshrl.u32 %v1629, 7
        %v1631 = vsub.s32 %v1628, %v1630
        %v1632 = vrot.slane %v1618, %v1631
        %v1633 = vcombine.high %v1625, %v1625
        %v1634 = vcombine.high %v1632, %v1632
        %vm1639 = vcmask 516096
        %1640 = vst.msk [vmem:[%s239] sm:$0x1] %vm1639, %v1625
        %1641 = vst.msk [vmem:[%s239 + $0x2] sm:$0x1] %vm1639, %v1632
        %1642 = vst.msk [vmem:[%s239 + $0x4] sm:$0x1] %vm1639, %v1633
        %1643 = vst.msk [vmem:[%s239 + $0x6] sm:$0x1] %vm1639, %v1634
        %v1644 = vld [vmem:[%s247 + $0x1] sm:$0x1]
        %v1645 = vld [vmem:[%s247 + $0x3] sm:$0x1]
        %v1646 = vld [vmem:[%s247 + $0x5] sm:$0x1]
        %v1647 = vld [vmem:[%s247 + $0x7] sm:$0x1]
        %v1652 = vrot.slane %v1645, 7
        %v1653 = vsel %vm323, %v1652, %v1644
        %v1654 = vrot.slane %v1646, 6
        %v1655 = vsel %vm326, %v1654, %v1653
        %v1656 = vrot.slane %v1647, 5
        %v1657 = vsel %vm329, %v1656, %v1655
        %v1658 = vsel %vm476, %v1657, 0
        %1660 = vmatprep.subr.mxu0 0.0
        %1661 = vmatpush1.msra.mxu0 %v1658
        %1662 = vmatprep.subr.mxu0 0.0
        %1663 = vmatpush1.msra.mxu0 0.0
        %1664 = vmatprep.subr.mxu0 0.0
        %1665 = vmatpush1.msra.mxu0 0.0
        %1666 = vmatprep.subr.mxu0 0.0
        %1667 = vmatpush1.msra.mxu0 0.0
        %1668 = vmatprep.subr.mxu0 0.0
        %1669 = vmatpush1.msra.mxu0 0.0
        %1670 = vmatprep.subr.mxu0 0.0
        %1671 = vmatpush1.msra.mxu0 0.0
        %1672 = vmatprep.subr.mxu0 0.0
        %1673 = vmatpush1.msra.mxu0 0.0
        %1674 = vmatprep.subr.mxu0 0.0
        %1675 = vmatpush1.msra.mxu0 0.0
        %1676 = vmatprep.subr.mxu0 0.0
        %1677 = vmatpush1.msra.mxu0 0.0
        %1678 = vmatprep.subr.mxu0 0.0
        %1679 = vmatpush1.msra.mxu0 0.0
        %1680 = vmatprep.subr.mxu0 0.0
        %1681 = vmatpush1.msra.mxu0 0.0
        %1682 = vmatprep.subr.mxu0 0.0
        %1683 = vmatpush1.msra.mxu0 0.0
        %1684 = vmatprep.subr.mxu0 0.0
        %1685 = vmatpush1.msra.mxu0 0.0
        %1686 = vmatprep.subr.mxu0 0.0
        %1687 = vmatpush1.msra.mxu0 0.0
        %1688 = vmatprep.subr.mxu0 0.0
        %1689 = vmatpush1.msra.mxu0 0.0
        %1690 = vmatprep.subr.mxu0 0.0
        %1691 = vmatpush1.msra.mxu0 0.0
        %1692 = vmatprep.subr.mxu0 0.0
        %1693 = vmatpush1.msra.mxu0 0.0
        %1694 = vmatprep.subr.mxu0 0.0
        %1695 = vmatpush1.msra.mxu0 0.0
        %1696 = vmatprep.subr.mxu0 0.0
        %1697 = vmatpush1.msra.mxu0 0.0
        %1698 = vmatprep.subr.mxu0 0.0
        %1699 = vmatpush1.msra.mxu0 0.0
        %1700 = vmatprep.subr.mxu0 0.0
        %1701 = vmatpush1.msra.mxu0 0.0
        %1702 = vmatprep.subr.mxu0 0.0
        %1703 = vmatpush1.msra.mxu0 0.0
        %1704 = vmatprep.subr.mxu0 0.0
        %1705 = vmatpush1.msra.mxu0 0.0
        %1706 = vmatprep.subr.mxu0 0.0
        %1707 = vmatpush1.msra.mxu0 0.0
        %1708 = vmatprep.subr.mxu0 0.0
        %1709 = vmatpush1.msra.mxu0 0.0
        %1710 = vmatprep.subr.mxu0 0.0
        %1711 = vmatpush1.msra.mxu0 0.0
        %1712 = vmatprep.subr.mxu0 0.0
        %1713 = vmatpush1.msra.mxu0 0.0
        %1714 = vmatprep.subr.mxu0 0.0
        %1715 = vmatpush1.msra.mxu0 0.0
        %1716 = vmatprep.subr.mxu0 0.0
        %1717 = vmatpush1.msra.mxu0 0.0
        %1718 = vmatprep.subr.mxu0 0.0
        %1719 = vmatpush1.msra.mxu0 0.0
        %1720 = vmatprep.subr.mxu0 0.0
        %1721 = vmatpush1.msra.mxu0 0.0
        %1722 = vmatprep.subr.mxu0 0.0
        %1723 = vmatpush1.msra.mxu0 0.0
        %1724 = vmatprep.mubr.f32.mxu0 0.0
        %1725 = vmatmul.mubr.f32.gmra.mrb[0].mxu0 %v333
        %v1726 = vpop.f32.mrb[0].mxu0
        %v1727 = vadd.f32 0.0, %v1726
        %v1728 = vpop.f32.mrb[0].mxu0
        %1729 = vmatprep.mubr.f32.mxu0 0.0
        %1730 = vmatmul.mubr.f32.gmra.mrb[0].mxu0 %v336
        %v1731 = vpop.f32.mrb[0].mxu0
        %v1732 = vadd.f32 0.0, %v1731
        %v1733 = vpop.f32.mrb[0].mxu0
        %1734 = vmatprep.mubr.f32.mxu0 0.0
        %1735 = vmatmul.mubr.f32.gmra.mrb[0].mxu0 %v339
        %v1736 = vpop.f32.mrb[0].mxu0
        %v1737 = vadd.f32 0.0, %v1736
        %v1738 = vpop.f32.mrb[0].mxu0
        %1739 = vmatprep.mubr.f32.mxu0 0.0
        %1740 = vmatmul.mubr.f32.gmra.mrb[0].mxu0 %v342
        %v1741 = vpop.f32.mrb[0].mxu0
        %v1742 = vadd.f32 0.0, %v1741
        %v1743 = vpop.f32.mrb[0].mxu0
        %1744 = vmatprep.mubr.f32.mxu0 0.0
        %1745 = vmatmul.mubr.f32.gmra.mrb[0].mxu0 %v345
        %v1746 = vpop.f32.mrb[0].mxu0
        %v1747 = vadd.f32 0.0, %v1746
        %v1748 = vpop.f32.mrb[0].mxu0
        %1749 = vmatprep.mubr.f32.mxu0 0.0
        %1750 = vmatmul.mubr.f32.gmra.mrb[0].mxu0 %v348
        %v1751 = vpop.f32.mrb[0].mxu0
        %v1752 = vadd.f32 0.0, %v1751
        %v1753 = vpop.f32.mrb[0].mxu0
        %1754 = vmatprep.mubr.f32.mxu0 0.0
        %1755 = vmatmul.mubr.f32.gmra.mrb[0].mxu0 %v351
        %v1756 = vpop.f32.mrb[0].mxu0
        %v1757 = vadd.f32 0.0, %v1756
        %v1758 = vpop.f32.mrb[0].mxu0
        %1759 = vmatprep.mubr.f32.mxu0 0.0
        %1760 = vmatmul.mubr.f32.gmra.mrb[0].mxu0 %v354
        %v1761 = vpop.f32.mrb[0].mxu0
        %v1762 = vadd.f32 0.0, %v1761
        %v1763 = vpop.f32.mrb[0].mxu0
        %1764 = vmatprep.mubr.f32.mxu0 0.0
        %1765 = vmatmul.mubr.f32.gmra.mrb[0].mxu0 %v357
        %v1766 = vpop.f32.mrb[0].mxu0
        %v1767 = vadd.f32 0.0, %v1766
        %v1768 = vpop.f32.mrb[0].mxu0
        %1769 = vmatprep.mubr.f32.mxu0 0.0
        %1770 = vmatmul.mubr.f32.gmra.mrb[0].mxu0 %v360
        %v1771 = vpop.f32.mrb[0].mxu0
        %v1772 = vadd.f32 0.0, %v1771
        %v1773 = vpop.f32.mrb[0].mxu0
        %1774 = vmatprep.mubr.f32.mxu0 0.0
        %1775 = vmatmul.mubr.f32.gmra.mrb[0].mxu0 %v363
        %v1776 = vpop.f32.mrb[0].mxu0
        %v1777 = vadd.f32 0.0, %v1776
        %v1778 = vpop.f32.mrb[0].mxu0
        %1779 = vmatprep.mubr.f32.mxu0 0.0
        %1780 = vmatmul.mubr.f32.gmra.mrb[0].mxu0 %v366
        %v1781 = vpop.f32.mrb[0].mxu0
        %v1782 = vadd.f32 0.0, %v1781
        %v1783 = vpop.f32.mrb[0].mxu0
        %1784 = vmatprep.mubr.f32.mxu0 0.0
        %1785 = vmatmul.mubr.f32.gmra.mrb[0].mxu0 %v369
        %v1786 = vpop.f32.mrb[0].mxu0
        %v1787 = vadd.f32 0.0, %v1786
        %v1788 = vpop.f32.mrb[0].mxu0
        %1789 = vmatprep.mubr.f32.mxu0 0.0
        %1790 = vmatmul.mubr.f32.gmra.mrb[0].mxu0 %v372
        %v1791 = vpop.f32.mrb[0].mxu0
        %v1792 = vadd.f32 0.0, %v1791
        %v1793 = vpop.f32.mrb[0].mxu0
        %1794 = vmatprep.mubr.f32.mxu0 0.0
        %1795 = vmatmul.mubr.f32.gmra.mrb[0].mxu0 %v375
        %v1796 = vpop.f32.mrb[0].mxu0
        %v1797 = vadd.f32 0.0, %v1796
        %v1798 = vpop.f32.mrb[0].mxu0
        %1799 = vmatprep.mubr.f32.mxu0 0.0
        %1800 = vmatmul.mubr.f32.gmra.mrb[0].mxu0 %v378
        %v1801 = vpop.f32.mrb[0].mxu0
        %v1802 = vadd.f32 0.0, %v1801
        %v1803 = vpop.f32.mrb[0].mxu0
        %1804 = vmatprep.mubr.f32.mxu0 0.0
        %1805 = vmatmul.mubr.f32.gmra.mrb[0].mxu0 %v381
        %v1806 = vpop.f32.mrb[0].mxu0
        %v1807 = vadd.f32 0.0, %v1806
        %v1808 = vpop.f32.mrb[0].mxu0
        %1809 = vmatprep.mubr.f32.mxu0 0.0
        %1810 = vmatmul.mubr.f32.gmra.mrb[0].mxu0 %v384
        %v1811 = vpop.f32.mrb[0].mxu0
        %v1812 = vadd.f32 0.0, %v1811
        %v1813 = vpop.f32.mrb[0].mxu0
        %1814 = vmatprep.mubr.f32.mxu0 0.0
        %1815 = vmatmul.mubr.f32.gmra.mrb[0].mxu0 %v387
        %v1816 = vpop.f32.mrb[0].mxu0
        %v1817 = vadd.f32 0.0, %v1816
        %v1818 = vpop.f32.mrb[0].mxu0
        %1819 = vmatprep.mubr.f32.mxu0 0.0
        %1820 = vmatmul.mubr.f32.gmra.mrb[0].mxu0 %v390
        %v1821 = vpop.f32.mrb[0].mxu0
        %v1822 = vadd.f32 0.0, %v1821
        %v1823 = vpop.f32.mrb[0].mxu0
        %1824 = vmatprep.mubr.f32.mxu0 0.0
        %1825 = vmatmul.mubr.f32.gmra.mrb[0].mxu0 %v393
        %v1826 = vpop.f32.mrb[0].mxu0
        %v1827 = vadd.f32 0.0, %v1826
        %v1828 = vpop.f32.mrb[0].mxu0
        %1829 = vmatprep.mubr.f32.mxu0 0.0
        %1830 = vmatmul.mubr.f32.gmra.mrb[0].mxu0 %v396
        %v1831 = vpop.f32.mrb[0].mxu0
        %v1832 = vadd.f32 0.0, %v1831
        %v1833 = vpop.f32.mrb[0].mxu0
        %1834 = vmatprep.mubr.f32.mxu0 0.0
        %1835 = vmatmul.mubr.f32.gmra.mrb[0].mxu0 %v399
        %v1836 = vpop.f32.mrb[0].mxu0
        %v1837 = vadd.f32 0.0, %v1836
        %v1838 = vpop.f32.mrb[0].mxu0
        %1839 = vmatprep.mubr.f32.mxu0 0.0
        %1840 = vmatmul.mubr.f32.gmra.mrb[0].mxu0 %v402
        %v1841 = vpop.f32.mrb[0].mxu0
        %v1842 = vadd.f32 0.0, %v1841
        %v1843 = vpop.f32.mrb[0].mxu0
        %1844 = vmatprep.mubr.f32.mxu0 0.0
        %1845 = vmatmul.mubr.f32.gmra.mrb[0].mxu0 %v405
        %v1846 = vpop.f32.mrb[0].mxu0
        %v1847 = vadd.f32 0.0, %v1846
        %v1848 = vpop.f32.mrb[0].mxu0
        %1849 = vmatprep.mubr.f32.mxu0 0.0
        %1850 = vmatmul.mubr.f32.gmra.mrb[0].mxu0 %v408
        %v1851 = vpop.f32.mrb[0].mxu0
        %v1852 = vadd.f32 0.0, %v1851
        %v1853 = vpop.f32.mrb[0].mxu0
        %1854 = vmatprep.mubr.f32.mxu0 0.0
        %1855 = vmatmul.mubr.f32.gmra.mrb[0].mxu0 %v411
        %v1856 = vpop.f32.mrb[0].mxu0
        %v1857 = vadd.f32 0.0, %v1856
        %v1858 = vpop.f32.mrb[0].mxu0
        %1859 = vmatprep.mubr.f32.mxu0 0.0
        %1860 = vmatmul.mubr.f32.gmra.mrb[0].mxu0 %v414
        %v1861 = vpop.f32.mrb[0].mxu0
        %v1862 = vadd.f32 0.0, %v1861
        %v1863 = vpop.f32.mrb[0].mxu0
        %1864 = vmatprep.mubr.f32.mxu0 0.0
        %1865 = vmatmul.mubr.f32.gmra.mrb[0].mxu0 %v417
        %v1866 = vpop.f32.mrb[0].mxu0
        %v1867 = vadd.f32 0.0, %v1866
        %v1868 = vpop.f32.mrb[0].mxu0
        %1869 = vmatprep.mubr.f32.mxu0 0.0
        %1870 = vmatmul.mubr.f32.gmra.mrb[0].mxu0 %v420
        %v1871 = vpop.f32.mrb[0].mxu0
        %v1872 = vadd.f32 0.0, %v1871
        %v1873 = vpop.f32.mrb[0].mxu0
        %1874 = vmatprep.mubr.f32.mxu0 0.0
        %1875 = vmatmul.mubr.f32.gmra.mrb[0].mxu0 %v423
        %v1876 = vpop.f32.mrb[0].mxu0
        %v1877 = vadd.f32 0.0, %v1876
        %v1878 = vpop.f32.mrb[0].mxu0
        %1879 = vmatprep.mubr.f32.mxu0 0.0
        %1880 = vmatmul.mubr.f32.gmra.mrb[0].mxu0 %v426
        %v1881 = vpop.f32.mrb[0].mxu0
        %v1882 = vadd.f32 0.0, %v1881
        %v1883 = vpop.f32.mrb[0].mxu0
        %1884 = vmatprep.mubr.f32.mxu0 0.0
        %1885 = vmatmul.mubr.f32.gmra.mrb[0].mxu0 %v429
        %v1886 = vpop.f32.mrb[0].mxu0
        %v1887 = vadd.f32 0.0, %v1886
        %v1888 = vpop.f32.mrb[0].mxu0
        %1889 = vmatprep.mubr.f32.mxu0 0.0
        %1890 = vmatmul.mubr.f32.gmra.mrb[0].mxu0 %v432
        %v1891 = vpop.f32.mrb[0].mxu0
        %v1892 = vadd.f32 0.0, %v1891
        %v1893 = vpop.f32.mrb[0].mxu0
        %1894 = vmatprep.mubr.f32.mxu0 0.0
        %1895 = vmatmul.mubr.f32.gmra.mrb[0].mxu0 %v435
        %v1896 = vpop.f32.mrb[0].mxu0
        %v1897 = vadd.f32 0.0, %v1896
        %v1898 = vpop.f32.mrb[0].mxu0
        %1899 = vmatprep.mubr.f32.mxu0 0.0
        %1900 = vmatmul.mubr.f32.gmra.mrb[0].mxu0 %v438
        %v1901 = vpop.f32.mrb[0].mxu0
        %v1902 = vadd.f32 0.0, %v1901
        %v1903 = vpop.f32.mrb[0].mxu0
        %1904 = vmatprep.mubr.f32.mxu0 0.0
        %1905 = vmatmul.mubr.f32.gmra.mrb[0].mxu0 %v441
        %v1906 = vpop.f32.mrb[0].mxu0
        %v1907 = vadd.f32 0.0, %v1906
        %v1908 = vpop.f32.mrb[0].mxu0
        %1909 = vmatprep.mubr.f32.mxu0 0.0
        %1910 = vmatmul.mubr.f32.gmra.mrb[0].mxu0 %v444
        %v1911 = vpop.f32.mrb[0].mxu0
        %v1912 = vadd.f32 0.0, %v1911
        %v1913 = vpop.f32.mrb[0].mxu0
        %1914 = vmatprep.mubr.f32.mxu0 0.0
        %1915 = vmatmul.mubr.f32.gmra.mrb[0].mxu0 %v447
        %v1916 = vpop.f32.mrb[0].mxu0
        %v1917 = vadd.f32 0.0, %v1916
        %v1918 = vpop.f32.mrb[0].mxu0
        %1919 = vmatprep.mubr.f32.mxu0 0.0
        %1920 = vmatmul.mubr.f32.gmra.mrb[0].mxu0 %v450
        %v1921 = vpop.f32.mrb[0].mxu0
        %v1922 = vadd.f32 0.0, %v1921
        %v1923 = vpop.f32.mrb[0].mxu0
        %1924 = vmatprep.mubr.f32.mxu0 0.0
        %1925 = vmatmul.mubr.f32.gmra.mrb[0].mxu0 %v453
        %v1926 = vpop.f32.mrb[0].mxu0
        %v1927 = vadd.f32 0.0, %v1926
        %v1928 = vpop.f32.mrb[0].mxu0
        %1929 = vmatprep.mubr.f32.mxu0 0.0
        %1930 = vmatmul.mubr.f32.gmra.mrb[0].mxu0 %v456
        %v1931 = vpop.f32.mrb[0].mxu0
        %v1932 = vadd.f32 0.0, %v1931
        %v1933 = vpop.f32.mrb[0].mxu0
        %1934 = vmatprep.mubr.f32.mxu0 0.0
        %1935 = vmatmul.mubr.f32.gmra.mrb[0].mxu0 %v459
        %v1936 = vpop.f32.mrb[0].mxu0
        %v1937 = vadd.f32 0.0, %v1936
        %v1938 = vpop.f32.mrb[0].mxu0
        %1939 = vmatprep.mubr.f32.mxu0 0.0
        %1940 = vmatmul.mubr.f32.gmra.mrb[0].mxu0 %v462
        %v1941 = vpop.f32.mrb[0].mxu0
        %v1942 = vadd.f32 0.0, %v1941
        %v1943 = vpop.f32.mrb[0].mxu0
        %1944 = vmatprep.mubr.f32.mxu0 0.0
        %1945 = vmatmul.mubr.f32.gmra.mrb[0].mxu0 %v465
        %v1946 = vpop.f32.mrb[0].mxu0
        %v1947 = vadd.f32 0.0, %v1946
        %v1948 = vpop.f32.mrb[0].mxu0
        %1949 = vmatprep.mubr.f32.mxu0 0.0
        %1950 = vmatmul.mubr.f32.gmra.mrb[0].mxu0 %v468
        %v1951 = vpop.f32.mrb[0].mxu0
        %v1952 = vadd.f32 0.0, %v1951
        %v1953 = vpop.f32.mrb[0].mxu0
        %1954 = vmatprep.mubr.f32.mxu0 0.0
        %1955 = vmatmul.mubr.f32.gmra.mrb[0].mxu0 %v471
        %v1956 = vpop.f32.mrb[0].mxu0
        %v1957 = vadd.f32 0.0, %v1956
        %v1958 = vpop.f32.mrb[0].mxu0
        %1959 = vmatprep.mubr.f32.mxu0 0.0
        %1960 = vmatmul.mubr.f32.gmra.mrb[0].mxu0 %v474
        %v1961 = vpop.f32.mrb[0].mxu0
        %v1962 = vadd.f32 0.0, %v1961
        %v1963 = vpop.f32.mrb[0].mxu0
        %1964 = vdwg.mxu0
        %v1965 = vsel %vm784, %v1727, -inf
        %v1966 = vsel %vm784, %v1732, -inf
        %v1967 = vmax.f32 %v1965, %v1966
        %v1968 = vsel %vm784, %v1737, -inf
        %v1969 = vmax.f32 %v1967, %v1968
        %v1970 = vsel %vm784, %v1742, -inf
        %v1971 = vmax.f32 %v1969, %v1970
        %v1972 = vrot.slane %v1971, 4
        %v1973 = vmax.f32 %v1971, %v1972
        %v1974 = vrot.slane %v1973, 2
        %v1975 = vmax.f32 %v1973, %v1974
        %v1976 = vrot.slane %v1975, 1
        %v1977 = vmax.f32 %v1975, %v1976
        %v1978 = vsel %vm784, %v1747, -inf
        %v1979 = vsel %vm784, %v1752, -inf
        %v1980 = vmax.f32 %v1978, %v1979
        %v1981 = vsel %vm784, %v1757, -inf
        %v1982 = vmax.f32 %v1980, %v1981
        %v1983 = vsel %vm784, %v1762, -inf
        %v1984 = vmax.f32 %v1982, %v1983
        %v1985 = vrot.slane %v1984, 4
        %v1986 = vmax.f32 %v1984, %v1985
        %v1987 = vrot.slane %v1986, 2
        %v1988 = vmax.f32 %v1986, %v1987
        %v1989 = vrot.slane %v1988, 1
        %v1990 = vmax.f32 %v1988, %v1989
        %v1991 = vsel %vm784, %v1767, -inf
        %v1992 = vsel %vm784, %v1772, -inf
        %v1993 = vmax.f32 %v1991, %v1992
        %v1994 = vsel %vm784, %v1777, -inf
        %v1995 = vmax.f32 %v1993, %v1994
        %v1996 = vsel %vm784, %v1782, -inf
        %v1997 = vmax.f32 %v1995, %v1996
        %v1998 = vrot.slane %v1997, 4
        %v1999 = vmax.f32 %v1997, %v1998
        %v2000 = vrot.slane %v1999, 2
        %v2001 = vmax.f32 %v1999, %v2000
        %v2002 = vrot.slane %v2001, 1
        %v2003 = vmax.f32 %v2001, %v2002
        %v2004 = vsel %vm784, %v1787, -inf
        %v2005 = vsel %vm784, %v1792, -inf
        %v2006 = vmax.f32 %v2004, %v2005
        %v2007 = vsel %vm784, %v1797, -inf
        %v2008 = vmax.f32 %v2006, %v2007
        %v2009 = vsel %vm784, %v1802, -inf
        %v2010 = vmax.f32 %v2008, %v2009
        %v2011 = vrot.slane %v2010, 4
        %v2012 = vmax.f32 %v2010, %v2011
        %v2013 = vrot.slane %v2012, 2
        %v2014 = vmax.f32 %v2012, %v2013
        %v2015 = vrot.slane %v2014, 1
        %v2016 = vmax.f32 %v2014, %v2015
        %v2017 = vsub.f32 %v1727, %v1977
        %v2018 = vsub.f32 %v1732, %v1977
        %v2019 = vsub.f32 %v1737, %v1977
        %v2020 = vsub.f32 %v1742, %v1977
        %v2021 = vsub.f32 %v1747, %v1990
        %v2022 = vsub.f32 %v1752, %v1990
        %v2023 = vsub.f32 %v1757, %v1990
        %v2024 = vsub.f32 %v1762, %v1990
        %v2025 = vsub.f32 %v1767, %v2003
        %v2026 = vsub.f32 %v1772, %v2003
        %v2027 = vsub.f32 %v1777, %v2003
        %v2028 = vsub.f32 %v1782, %v2003
        %v2029 = vsub.f32 %v1787, %v2016
        %v2030 = vsub.f32 %v1792, %v2016
        %v2031 = vsub.f32 %v1797, %v2016
        %v2032 = vsub.f32 %v1802, %v2016
        %v2033 = vmul.f32 %v2017, 1.442695
        %v2034 = vpow.pop %v2033
        %v2035 = vmul.f32 %v2018, 1.442695
        %v2036 = vpow.pop %v2035
        %v2037 = vmul.f32 %v2019, 1.442695
        %v2038 = vpow.pop %v2037
        %v2039 = vmul.f32 %v2020, 1.442695
        %v2040 = vpow.pop %v2039
        %v2041 = vmul.f32 %v2021, 1.442695
        %v2042 = vpow.pop %v2041
        %v2043 = vmul.f32 %v2022, 1.442695
        %v2044 = vpow.pop %v2043
        %v2045 = vmul.f32 %v2023, 1.442695
        %v2046 = vpow.pop %v2045
        %v2047 = vmul.f32 %v2024, 1.442695
        %v2048 = vpow.pop %v2047
        %v2049 = vmul.f32 %v2025, 1.442695
        %v2050 = vpow.pop %v2049
        %v2051 = vmul.f32 %v2026, 1.442695
        %v2052 = vpow.pop %v2051
        %v2053 = vmul.f32 %v2027, 1.442695
        %v2054 = vpow.pop %v2053
        %v2055 = vmul.f32 %v2028, 1.442695
        %v2056 = vpow.pop %v2055
        %v2057 = vmul.f32 %v2029, 1.442695
        %v2058 = vpow.pop %v2057
        %v2059 = vmul.f32 %v2030, 1.442695
        %v2060 = vpow.pop %v2059
        %v2061 = vmul.f32 %v2031, 1.442695
        %v2062 = vpow.pop %v2061
        %v2063 = vmul.f32 %v2032, 1.442695
        %v2064 = vpow.pop %v2063
        %v2065 = vsel %vm784, %v2034, 0.0
        %v2066 = vsel %vm784, %v2036, 0.0
        %v2067 = vadd.f32 %v2065, %v2066
        %v2068 = vsel %vm784, %v2038, 0.0
        %v2069 = vadd.f32 %v2067, %v2068
        %v2070 = vsel %vm784, %v2040, 0.0
        %v2071 = vadd.f32 %v2069, %v2070
        %v2072 = vrot.slane %v2071, 4
        %v2073 = vadd.f32 %v2071, %v2072
        %v2074 = vrot.slane %v2073, 2
        %v2075 = vadd.f32 %v2073, %v2074
        %v2076 = vrot.slane %v2075, 1
        %v2077 = vadd.f32 %v2075, %v2076
        %v2078 = vsel %vm784, %v2042, 0.0
        %v2079 = vsel %vm784, %v2044, 0.0
        %v2080 = vadd.f32 %v2078, %v2079
        %v2081 = vsel %vm784, %v2046, 0.0
        %v2082 = vadd.f32 %v2080, %v2081
        %v2083 = vsel %vm784, %v2048, 0.0
        %v2084 = vadd.f32 %v2082, %v2083
        %v2085 = vrot.slane %v2084, 4
        %v2086 = vadd.f32 %v2084, %v2085
        %v2087 = vrot.slane %v2086, 2
        %v2088 = vadd.f32 %v2086, %v2087
        %v2089 = vrot.slane %v2088, 1
        %v2090 = vadd.f32 %v2088, %v2089
        %v2091 = vsel %vm784, %v2050, 0.0
        %v2092 = vsel %vm784, %v2052, 0.0
        %v2093 = vadd.f32 %v2091, %v2092
        %v2094 = vsel %vm784, %v2054, 0.0
        %v2095 = vadd.f32 %v2093, %v2094
        %v2096 = vsel %vm784, %v2056, 0.0
        %v2097 = vadd.f32 %v2095, %v2096
        %v2098 = vrot.slane %v2097, 4
        %v2099 = vadd.f32 %v2097, %v2098
        %v2100 = vrot.slane %v2099, 2
        %v2101 = vadd.f32 %v2099, %v2100
        %v2102 = vrot.slane %v2101, 1
        %v2103 = vadd.f32 %v2101, %v2102
        %v2104 = vsel %vm784, %v2058, 0.0
        %v2105 = vsel %vm784, %v2060, 0.0
        %v2106 = vadd.f32 %v2104, %v2105
        %v2107 = vsel %vm784, %v2062, 0.0
        %v2108 = vadd.f32 %v2106, %v2107
        %v2109 = vsel %vm784, %v2064, 0.0
        %v2110 = vadd.f32 %v2108, %v2109
        %v2111 = vrot.slane %v2110, 4
        %v2112 = vadd.f32 %v2110, %v2111
        %v2113 = vrot.slane %v2112, 2
        %v2114 = vadd.f32 %v2112, %v2113
        %v2115 = vrot.slane %v2114, 1
        %v2116 = vadd.f32 %v2114, %v2115
        %v2117 = vrcp.pop %v2077
        %v2118 = vrcp.pop %v2090
        %v2119 = vrcp.pop %v2103
        %v2120 = vrcp.pop %v2116
        %v2121 = vmul.f32 %v2034, %v2117
        %v2122 = vmul.f32 %v2036, %v2117
        %v2123 = vmul.f32 %v2038, %v2117
        %v2124 = vmul.f32 %v2040, %v2117
        %v2125 = vmul.f32 %v2042, %v2118
        %v2126 = vmul.f32 %v2044, %v2118
        %v2127 = vmul.f32 %v2046, %v2118
        %v2128 = vmul.f32 %v2048, %v2118
        %v2129 = vmul.f32 %v2050, %v2119
        %v2130 = vmul.f32 %v2052, %v2119
        %v2131 = vmul.f32 %v2054, %v2119
        %v2132 = vmul.f32 %v2056, %v2119
        %v2133 = vmul.f32 %v2058, %v2120
        %v2134 = vmul.f32 %v2060, %v2120
        %v2135 = vmul.f32 %v2062, %v2120
        %v2136 = vmul.f32 %v2064, %v2120
        %v2137 = vsel %vm784, %v1807, -inf
        %2138 = vmax.xlane.f32.xlu0 %v2137
        %v2139 = vpop.xlane.xlu0 %2138
        %v2140 = vsel %vm784, %v1812, -inf
        %2141 = vmax.xlane.f32.xlu0 %v2140
        %v2142 = vpop.xlane.xlu0 %2141
        %v2143 = vsel %vm784, %v1817, -inf
        %2144 = vmax.xlane.f32.xlu0 %v2143
        %v2145 = vpop.xlane.xlu0 %2144
        %v2146 = vsel %vm784, %v1822, -inf
        %2147 = vmax.xlane.f32.xlu0 %v2146
        %v2148 = vpop.xlane.xlu0 %2147
        %v2149 = vsel %vm784, %v1827, -inf
        %2150 = vmax.xlane.f32.xlu0 %v2149
        %v2151 = vpop.xlane.xlu0 %2150
        %v2152 = vsel %vm784, %v1832, -inf
        %2153 = vmax.xlane.f32.xlu0 %v2152
        %v2154 = vpop.xlane.xlu0 %2153
        %v2155 = vsel %vm784, %v1837, -inf
        %2156 = vmax.xlane.f32.xlu0 %v2155
        %v2157 = vpop.xlane.xlu0 %2156
        %v2158 = vsel %vm784, %v1842, -inf
        %2159 = vmax.xlane.f32.xlu0 %v2158
        %v2160 = vpop.xlane.xlu0 %2159
        %v2161 = vsel %vm784, %v1847, -inf
        %2162 = vmax.xlane.f32.xlu0 %v2161
        %v2163 = vpop.xlane.xlu0 %2162
        %v2164 = vsel %vm784, %v1852, -inf
        %2165 = vmax.xlane.f32.xlu0 %v2164
        %v2166 = vpop.xlane.xlu0 %2165
        %v2167 = vsel %vm784, %v1857, -inf
        %2168 = vmax.xlane.f32.xlu0 %v2167
        %v2169 = vpop.xlane.xlu0 %2168
        %v2170 = vsel %vm784, %v1862, -inf
        %2171 = vmax.xlane.f32.xlu0 %v2170
        %v2172 = vpop.xlane.xlu0 %2171
        %v2173 = vsel %vm784, %v1867, -inf
        %2174 = vmax.xlane.f32.xlu0 %v2173
        %v2175 = vpop.xlane.xlu0 %2174
        %v2176 = vsel %vm784, %v1872, -inf
        %2177 = vmax.xlane.f32.xlu0 %v2176
        %v2178 = vpop.xlane.xlu0 %2177
        %v2179 = vsel %vm784, %v1877, -inf
        %2180 = vmax.xlane.f32.xlu0 %v2179
        %v2181 = vpop.xlane.xlu0 %2180
        %v2182 = vsel %vm784, %v1882, -inf
        %2183 = vmax.xlane.f32.xlu0 %v2182
        %v2184 = vpop.xlane.xlu0 %2183
        %v2185 = vsub.f32 %v1807, %v2139
        %v2186 = vsub.f32 %v1812, %v2142
        %v2187 = vsub.f32 %v1817, %v2145
        %v2188 = vsub.f32 %v1822, %v2148
        %v2189 = vsub.f32 %v1827, %v2151
        %v2190 = vsub.f32 %v1832, %v2154
        %v2191 = vsub.f32 %v1837, %v2157
        %v2192 = vsub.f32 %v1842, %v2160
        %v2193 = vsub.f32 %v1847, %v2163
        %v2194 = vsub.f32 %v1852, %v2166
        %v2195 = vsub.f32 %v1857, %v2169
        %v2196 = vsub.f32 %v1862, %v2172
        %v2197 = vsub.f32 %v1867, %v2175
        %v2198 = vsub.f32 %v1872, %v2178
        %v2199 = vsub.f32 %v1877, %v2181
        %v2200 = vsub.f32 %v1882, %v2184
        %v2201 = vmul.f32 %v2185, 1.442695
        %v2202 = vpow.pop %v2201
        %v2203 = vmul.f32 %v2186, 1.442695
        %v2204 = vpow.pop %v2203
        %v2205 = vmul.f32 %v2187, 1.442695
        %v2206 = vpow.pop %v2205
        %v2207 = vmul.f32 %v2188, 1.442695
        %v2208 = vpow.pop %v2207
        %v2209 = vmul.f32 %v2189, 1.442695
        %v2210 = vpow.pop %v2209
        %v2211 = vmul.f32 %v2190, 1.442695
        %v2212 = vpow.pop %v2211
        %v2213 = vmul.f32 %v2191, 1.442695
        %v2214 = vpow.pop %v2213
        %v2215 = vmul.f32 %v2192, 1.442695
        %v2216 = vpow.pop %v2215
        %v2217 = vmul.f32 %v2193, 1.442695
        %v2218 = vpow.pop %v2217
        %v2219 = vmul.f32 %v2194, 1.442695
        %v2220 = vpow.pop %v2219
        %v2221 = vmul.f32 %v2195, 1.442695
        %v2222 = vpow.pop %v2221
        %v2223 = vmul.f32 %v2196, 1.442695
        %v2224 = vpow.pop %v2223
        %v2225 = vmul.f32 %v2197, 1.442695
        %v2226 = vpow.pop %v2225
        %v2227 = vmul.f32 %v2198, 1.442695
        %v2228 = vpow.pop %v2227
        %v2229 = vmul.f32 %v2199, 1.442695
        %v2230 = vpow.pop %v2229
        %v2231 = vmul.f32 %v2200, 1.442695
        %v2232 = vpow.pop %v2231
        %v2233 = vsel %vm784, %v2202, 0.0
        %2234 = vadd.xlane.f32.xlu0 %v2233
        %v2235 = vpop.xlane.xlu0 %2234
        %v2236 = vsel %vm784, %v2204, 0.0
        %2237 = vadd.xlane.f32.xlu0 %v2236
        %v2238 = vpop.xlane.xlu0 %2237
        %v2239 = vsel %vm784, %v2206, 0.0
        %2240 = vadd.xlane.f32.xlu0 %v2239
        %v2241 = vpop.xlane.xlu0 %2240
        %v2242 = vsel %vm784, %v2208, 0.0
        %2243 = vadd.xlane.f32.xlu0 %v2242
        %v2244 = vpop.xlane.xlu0 %2243
        %v2245 = vsel %vm784, %v2210, 0.0
        %2246 = vadd.xlane.f32.xlu0 %v2245
        %v2247 = vpop.xlane.xlu0 %2246
        %v2248 = vsel %vm784, %v2212, 0.0
        %2249 = vadd.xlane.f32.xlu0 %v2248
        %v2250 = vpop.xlane.xlu0 %2249
        %v2251 = vsel %vm784, %v2214, 0.0
        %2252 = vadd.xlane.f32.xlu0 %v2251
        %v2253 = vpop.xlane.xlu0 %2252
        %v2254 = vsel %vm784, %v2216, 0.0
        %2255 = vadd.xlane.f32.xlu0 %v2254
        %v2256 = vpop.xlane.xlu0 %2255
        %v2257 = vsel %vm784, %v2218, 0.0
        %2258 = vadd.xlane.f32.xlu0 %v2257
        %v2259 = vpop.xlane.xlu0 %2258
        %v2260 = vsel %vm784, %v2220, 0.0
        %2261 = vadd.xlane.f32.xlu0 %v2260
        %v2262 = vpop.xlane.xlu0 %2261
        %v2263 = vsel %vm784, %v2222, 0.0
        %2264 = vadd.xlane.f32.xlu0 %v2263
        %v2265 = vpop.xlane.xlu0 %2264
        %v2266 = vsel %vm784, %v2224, 0.0
        %2267 = vadd.xlane.f32.xlu0 %v2266
        %v2268 = vpop.xlane.xlu0 %2267
        %v2269 = vsel %vm784, %v2226, 0.0
        %2270 = vadd.xlane.f32.xlu0 %v2269
        %v2271 = vpop.xlane.xlu0 %2270
        %v2272 = vsel %vm784, %v2228, 0.0
        %2273 = vadd.xlane.f32.xlu0 %v2272
        %v2274 = vpop.xlane.xlu0 %2273
        %v2275 = vsel %vm784, %v2230, 0.0
        %2276 = vadd.xlane.f32.xlu0 %v2275
        %v2277 = vpop.xlane.xlu0 %2276
        %v2278 = vsel %vm784, %v2232, 0.0
        %2279 = vadd.xlane.f32.xlu0 %v2278
        %v2280 = vpop.xlane.xlu0 %2279
        %v2281 = vrcp.pop %v2235
        %v2282 = vrcp.pop %v2238
        %v2283 = vrcp.pop %v2241
        %v2284 = vrcp.pop %v2244
        %v2285 = vrcp.pop %v2247
        %v2286 = vrcp.pop %v2250
        %v2287 = vrcp.pop %v2253
        %v2288 = vrcp.pop %v2256
        %v2289 = vrcp.pop %v2259
        %v2290 = vrcp.pop %v2262
        %v2291 = vrcp.pop %v2265
        %v2292 = vrcp.pop %v2268
        %v2293 = vrcp.pop %v2271
        %v2294 = vrcp.pop %v2274
        %v2295 = vrcp.pop %v2277
        %v2296 = vrcp.pop %v2280
        %v2297 = vmul.f32 %v2202, %v2281
        %v2298 = vmul.f32 %v2204, %v2282
        %v2299 = vmul.f32 %v2206, %v2283
        %v2300 = vmul.f32 %v2208, %v2284
        %v2301 = vmul.f32 %v2210, %v2285
        %v2302 = vmul.f32 %v2212, %v2286
        %v2303 = vmul.f32 %v2214, %v2287
        %v2304 = vmul.f32 %v2216, %v2288
        %v2305 = vmul.f32 %v2218, %v2289
        %v2306 = vmul.f32 %v2220, %v2290
        %v2307 = vmul.f32 %v2222, %v2291
        %v2308 = vmul.f32 %v2224, %v2292
        %v2309 = vmul.f32 %v2226, %v2293
        %v2310 = vmul.f32 %v2228, %v2294
        %v2311 = vmul.f32 %v2230, %v2295
        %v2312 = vmul.f32 %v2232, %v2296
        %v2314 = vsel %vm784, %v1887, 0
        %v2317 = vsel %vm784, %v1892, 0
        %v2320 = vsel %vm784, %v1897, 0
        %v2323 = vsel %vm784, %v1902, 0
        %v2326 = vsel %vm784, %v1907, 0
        %v2329 = vsel %vm784, %v1912, 0
        %v2332 = vsel %vm784, %v1917, 0
        %v2335 = vsel %vm784, %v1922, 0
        %v2338 = vsel %vm784, %v1927, 0
        %v2341 = vsel %vm784, %v1932, 0
        %v2344 = vsel %vm784, %v1937, 0
        %v2347 = vsel %vm784, %v1942, 0
        %v2350 = vsel %vm784, %v1947, 0
        %v2353 = vsel %vm784, %v1952, 0
        %v2356 = vsel %vm784, %v1957, 0
        %v2359 = vsel %vm784, %v1962, 0
        %v2362 = vsel %vm784, %v2297, 0
        %v2365 = vsel %vm784, %v2298, 0
        %v2368 = vsel %vm784, %v2299, 0
        %v2371 = vsel %vm784, %v2300, 0
        %v2374 = vsel %vm784, %v2301, 0
        %v2377 = vsel %vm784, %v2302, 0
        %v2380 = vsel %vm784, %v2303, 0
        %v2383 = vsel %vm784, %v2304, 0
        %v2386 = vsel %vm784, %v2305, 0
        %v2389 = vsel %vm784, %v2306, 0
        %v2392 = vsel %vm784, %v2307, 0
        %v2395 = vsel %vm784, %v2308, 0
        %v2398 = vsel %vm784, %v2309, 0
        %v2401 = vsel %vm784, %v2310, 0
        %v2404 = vsel %vm784, %v2311, 0
        %v2407 = vsel %vm784, %v2312, 0
        %2409 = vmatprep.subr.mxu0 0.0
        %2410 = vmatpush1.xpose.msra.mxu0 %v2362
        %2411 = vmatprep.subr.mxu0 0.0
        %2412 = vmatpush1.xpose.msra.mxu0 %v2365
        %2413 = vmatprep.subr.mxu0 0.0
        %2414 = vmatpush1.xpose.msra.mxu0 %v2368
        %2415 = vmatprep.subr.mxu0 0.0
        %2416 = vmatpush1.xpose.msra.mxu0 %v2371
        %2417 = vmatprep.subr.mxu0 0.0
        %2418 = vmatpush1.xpose.msra.mxu0 %v2374
        %2419 = vmatprep.subr.mxu0 0.0
        %2420 = vmatpush1.xpose.msra.mxu0 %v2377
        %2421 = vmatprep.subr.mxu0 0.0
        %2422 = vmatpush1.xpose.msra.mxu0 %v2380
        %2423 = vmatprep.subr.mxu0 0.0
        %2424 = vmatpush1.xpose.msra.mxu0 %v2383
        %2425 = vmatprep.subr.mxu0 0.0
        %2426 = vmatpush1.xpose.msra.mxu0 %v2386
        %2427 = vmatprep.subr.mxu0 0.0
        %2428 = vmatpush1.xpose.msra.mxu0 %v2389
        %2429 = vmatprep.subr.mxu0 0.0
        %2430 = vmatpush1.xpose.msra.mxu0 %v2392
        %2431 = vmatprep.subr.mxu0 0.0
        %2432 = vmatpush1.xpose.msra.mxu0 %v2395
        %2433 = vmatprep.subr.mxu0 0.0
        %2434 = vmatpush1.xpose.msra.mxu0 %v2398
        %2435 = vmatprep.subr.mxu0 0.0
        %2436 = vmatpush1.xpose.msra.mxu0 %v2401
        %2437 = vmatprep.subr.mxu0 0.0
        %2438 = vmatpush1.xpose.msra.mxu0 %v2404
        %2439 = vmatprep.subr.mxu0 0.0
        %2440 = vmatpush1.xpose.msra.mxu0 %v2407
        %2441 = vmatprep.subr.mxu0 0.0
        %2442 = vmatpush1.xpose.msra.mxu0 0.0
        %2443 = vmatprep.subr.mxu0 0.0
        %2444 = vmatpush1.xpose.msra.mxu0 0.0
        %2445 = vmatprep.subr.mxu0 0.0
        %2446 = vmatpush1.xpose.msra.mxu0 0.0
        %2447 = vmatprep.subr.mxu0 0.0
        %2448 = vmatpush1.xpose.msra.mxu0 0.0
        %2449 = vmatprep.subr.mxu0 0.0
        %2450 = vmatpush1.xpose.msra.mxu0 0.0
        %2451 = vmatprep.subr.mxu0 0.0
        %2452 = vmatpush1.xpose.msra.mxu0 0.0
        %2453 = vmatprep.subr.mxu0 0.0
        %2454 = vmatpush1.xpose.msra.mxu0 0.0
        %2455 = vmatprep.subr.mxu0 0.0
        %2456 = vmatpush1.xpose.msra.mxu0 0.0
        %2457 = vmatprep.subr.mxu0 0.0
        %2458 = vmatpush1.xpose.msra.mxu0 0.0
        %2459 = vmatprep.subr.mxu0 0.0
        %2460 = vmatpush1.xpose.msra.mxu0 0.0
        %2461 = vmatprep.subr.mxu0 0.0
        %2462 = vmatpush1.xpose.msra.mxu0 0.0
        %2463 = vmatprep.subr.mxu0 0.0
        %2464 = vmatpush1.xpose.msra.mxu0 0.0
        %2465 = vmatprep.subr.mxu0 0.0
        %2466 = vmatpush1.xpose.msra.mxu0 0.0
        %2467 = vmatprep.subr.mxu0 0.0
        %2468 = vmatpush1.xpose.msra.mxu0 0.0
        %2469 = vmatprep.subr.mxu0 0.0
        %2470 = vmatpush1.xpose.msra.mxu0 0.0
        %2471 = vmatprep.subr.mxu0 0.0
        %2472 = vmatpush1.xpose.msra.mxu0 0.0
        %2473 = vmatprep.mubr.f32.mxu0 0.0
        %2474 = vmatmul.mubr.f32.gmra.mrb[0].mxu0 %v2314
        %v2475 = vpop.f32.mrb[0].mxu0
        %v2476 = vadd.f32 0.0, %v2475
        %v2477 = vpop.f32.mrb[0].mxu0
        %2478 = vmatprep.mubr.f32.mxu0 0.0
        %2479 = vmatmul.mubr.f32.gmra.mrb[0].mxu0 %v2317
        %v2480 = vpop.f32.mrb[0].mxu0
        %v2481 = vadd.f32 0.0, %v2480
        %v2482 = vpop.f32.mrb[0].mxu0
        %2483 = vmatprep.mubr.f32.mxu0 0.0
        %2484 = vmatmul.mubr.f32.gmra.mrb[0].mxu0 %v2320
        %v2485 = vpop.f32.mrb[0].mxu0
        %v2486 = vadd.f32 0.0, %v2485
        %v2487 = vpop.f32.mrb[0].mxu0
        %2488 = vmatprep.mubr.f32.mxu0 0.0
        %2489 = vmatmul.mubr.f32.gmra.mrb[0].mxu0 %v2323
        %v2490 = vpop.f32.mrb[0].mxu0
        %v2491 = vadd.f32 0.0, %v2490
        %v2492 = vpop.f32.mrb[0].mxu0
        %2493 = vmatprep.mubr.f32.mxu0 0.0
        %2494 = vmatmul.mubr.f32.gmra.mrb[0].mxu0 %v2326
        %v2495 = vpop.f32.mrb[0].mxu0
        %v2496 = vadd.f32 0.0, %v2495
        %v2497 = vpop.f32.mrb[0].mxu0
        %2498 = vmatprep.mubr.f32.mxu0 0.0
        %2499 = vmatmul.mubr.f32.gmra.mrb[0].mxu0 %v2329
        %v2500 = vpop.f32.mrb[0].mxu0
        %v2501 = vadd.f32 0.0, %v2500
        %v2502 = vpop.f32.mrb[0].mxu0
        %2503 = vmatprep.mubr.f32.mxu0 0.0
        %2504 = vmatmul.mubr.f32.gmra.mrb[0].mxu0 %v2332
        %v2505 = vpop.f32.mrb[0].mxu0
        %v2506 = vadd.f32 0.0, %v2505
        %v2507 = vpop.f32.mrb[0].mxu0
        %2508 = vmatprep.mubr.f32.mxu0 0.0
        %2509 = vmatmul.mubr.f32.gmra.mrb[0].mxu0 %v2335
        %v2510 = vpop.f32.mrb[0].mxu0
        %v2511 = vadd.f32 0.0, %v2510
        %v2512 = vpop.f32.mrb[0].mxu0
        %2513 = vmatprep.mubr.f32.mxu0 0.0
        %2514 = vmatmul.mubr.f32.gmra.mrb[0].mxu0 %v2338
        %v2515 = vpop.f32.mrb[0].mxu0
        %v2516 = vadd.f32 0.0, %v2515
        %v2517 = vpop.f32.mrb[0].mxu0
        %2518 = vmatprep.mubr.f32.mxu0 0.0
        %2519 = vmatmul.mubr.f32.gmra.mrb[0].mxu0 %v2341
        %v2520 = vpop.f32.mrb[0].mxu0
        %v2521 = vadd.f32 0.0, %v2520
        %v2522 = vpop.f32.mrb[0].mxu0
        %2523 = vmatprep.mubr.f32.mxu0 0.0
        %2524 = vmatmul.mubr.f32.gmra.mrb[0].mxu0 %v2344
        %v2525 = vpop.f32.mrb[0].mxu0
        %v2526 = vadd.f32 0.0, %v2525
        %v2527 = vpop.f32.mrb[0].mxu0
        %2528 = vmatprep.mubr.f32.mxu0 0.0
        %2529 = vmatmul.mubr.f32.gmra.mrb[0].mxu0 %v2347
        %v2530 = vpop.f32.mrb[0].mxu0
        %v2531 = vadd.f32 0.0, %v2530
        %v2532 = vpop.f32.mrb[0].mxu0
        %2533 = vmatprep.mubr.f32.mxu0 0.0
        %2534 = vmatmul.mubr.f32.gmra.mrb[0].mxu0 %v2350
        %v2535 = vpop.f32.mrb[0].mxu0
        %v2536 = vadd.f32 0.0, %v2535
        %v2537 = vpop.f32.mrb[0].mxu0
        %2538 = vmatprep.mubr.f32.mxu0 0.0
        %2539 = vmatmul.mubr.f32.gmra.mrb[0].mxu0 %v2353
        %v2540 = vpop.f32.mrb[0].mxu0
        %v2541 = vadd.f32 0.0, %v2540
        %v2542 = vpop.f32.mrb[0].mxu0
        %2543 = vmatprep.mubr.f32.mxu0 0.0
        %2544 = vmatmul.mubr.f32.gmra.mrb[0].mxu0 %v2356
        %v2545 = vpop.f32.mrb[0].mxu0
        %v2546 = vadd.f32 0.0, %v2545
        %v2547 = vpop.f32.mrb[0].mxu0
        %2548 = vmatprep.mubr.f32.mxu0 0.0
        %2549 = vmatmul.mubr.f32.gmra.mrb[0].mxu0 %v2359
        %v2550 = vpop.f32.mrb[0].mxu0
        %v2551 = vadd.f32 0.0, %v2550
        %v2552 = vpop.f32.mrb[0].mxu0
        %2553 = vdwg.mxu0
        %v2554 = vmul.f32 %v2476, %v298
        %v2555 = vmul.f32 %v2481, %v299
        %v2556 = vmul.f32 %v2486, %v300
        %v2557 = vmul.f32 %v2491, %v301
        %v2558 = vmul.f32 %v2496, %v302
        %v2559 = vmul.f32 %v2501, %v303
        %v2560 = vmul.f32 %v2506, %v304
        %v2561 = vmul.f32 %v2511, %v305
        %v2562 = vmul.f32 %v2516, %v306
        %v2563 = vmul.f32 %v2521, %v307
        %v2564 = vmul.f32 %v2526, %v308
        %v2565 = vmul.f32 %v2531, %v309
        %v2566 = vmul.f32 %v2536, %v310
        %v2567 = vmul.f32 %v2541, %v311
        %v2568 = vmul.f32 %v2546, %v312
        %v2569 = vmul.f32 %v2551, %v313
        %2570 = vmatprep.subr.mxu0 0.0
        %2571 = vmatpush1.msra.mxu0 %v2121
        %2572 = vmatprep.subr.mxu0 0.0
        %2573 = vmatpush1.msra.mxu0 %v2122
        %2574 = vmatprep.subr.mxu0 0.0
        %2575 = vmatpush1.msra.mxu0 %v2123
        %2576 = vmatprep.subr.mxu0 0.0
        %2577 = vmatpush1.msra.mxu0 %v2124
        %2578 = vmatprep.subr.mxu0 0.0
        %2579 = vmatpush1.msra.mxu0 %v2125
        %2580 = vmatprep.subr.mxu0 0.0
        %2581 = vmatpush1.msra.mxu0 %v2126
        %2582 = vmatprep.subr.mxu0 0.0
        %2583 = vmatpush1.msra.mxu0 %v2127
        %2584 = vmatprep.subr.mxu0 0.0
        %2585 = vmatpush1.msra.mxu0 %v2128
        %2586 = vmatprep.subr.mxu0 0.0
        %2587 = vmatpush1.msra.mxu0 %v2129
        %2588 = vmatprep.subr.mxu0 0.0
        %2589 = vmatpush1.msra.mxu0 %v2130
        %2590 = vmatprep.subr.mxu0 0.0
        %2591 = vmatpush1.msra.mxu0 %v2131
        %2592 = vmatprep.subr.mxu0 0.0
        %2593 = vmatpush1.msra.mxu0 %v2132
        %2594 = vmatprep.subr.mxu0 0.0
        %2595 = vmatpush1.msra.mxu0 %v2133
        %2596 = vmatprep.subr.mxu0 0.0
        %2597 = vmatpush1.msra.mxu0 %v2134
        %2598 = vmatprep.subr.mxu0 0.0
        %2599 = vmatpush1.msra.mxu0 %v2135
        %2600 = vmatprep.subr.mxu0 0.0
        %2601 = vmatpush1.msra.mxu0 %v2136
        %2602 = vmatprep.subr.mxu0 0.0
        %2603 = vmatpush1.msra.mxu0 0.0
        %2604 = vmatprep.subr.mxu0 0.0
        %2605 = vmatpush1.msra.mxu0 0.0
        %2606 = vmatprep.subr.mxu0 0.0
        %2607 = vmatpush1.msra.mxu0 0.0
        %2608 = vmatprep.subr.mxu0 0.0
        %2609 = vmatpush1.msra.mxu0 0.0
        %2610 = vmatprep.subr.mxu0 0.0
        %2611 = vmatpush1.msra.mxu0 0.0
        %2612 = vmatprep.subr.mxu0 0.0
        %2613 = vmatpush1.msra.mxu0 0.0
        %2614 = vmatprep.subr.mxu0 0.0
        %2615 = vmatpush1.msra.mxu0 0.0
        %2616 = vmatprep.subr.mxu0 0.0
        %2617 = vmatpush1.msra.mxu0 0.0
        %2618 = vmatprep.subr.mxu0 0.0
        %2619 = vmatpush1.msra.mxu0 0.0
        %2620 = vmatprep.subr.mxu0 0.0
        %2621 = vmatpush1.msra.mxu0 0.0
        %2622 = vmatprep.subr.mxu0 0.0
        %2623 = vmatpush1.msra.mxu0 0.0
        %2624 = vmatprep.subr.mxu0 0.0
        %2625 = vmatpush1.msra.mxu0 0.0
        %2626 = vmatprep.subr.mxu0 0.0
        %2627 = vmatpush1.msra.mxu0 0.0
        %2628 = vmatprep.subr.mxu0 0.0
        %2629 = vmatpush1.msra.mxu0 0.0
        %2630 = vmatprep.subr.mxu0 0.0
        %2631 = vmatpush1.msra.mxu0 0.0
        %2632 = vmatprep.subr.mxu0 0.0
        %2633 = vmatpush1.msra.mxu0 0.0
        %2634 = vmatprep.mubr.f32.mxu0 0.0
        %2635 = vmatmul.mubr.f32.gmra.mrb[0].mxu0 %v2554
        %v2636 = vpop.f32.mrb[0].mxu0
        %v2637 = vadd.f32 0.0, %v2636
        %v2638 = vpop.f32.mrb[0].mxu0
        %2639 = vmatprep.mubr.f32.mxu0 0.0
        %2640 = vmatmul.mubr.f32.gmra.mrb[0].mxu0 %v2555
        %v2641 = vpop.f32.mrb[0].mxu0
        %v2642 = vadd.f32 0.0, %v2641
        %v2643 = vpop.f32.mrb[0].mxu0
        %2644 = vmatprep.mubr.f32.mxu0 0.0
        %2645 = vmatmul.mubr.f32.gmra.mrb[0].mxu0 %v2556
        %v2646 = vpop.f32.mrb[0].mxu0
        %v2647 = vadd.f32 0.0, %v2646
        %v2648 = vpop.f32.mrb[0].mxu0
        %2649 = vmatprep.mubr.f32.mxu0 0.0
        %2650 = vmatmul.mubr.f32.gmra.mrb[0].mxu0 %v2557
        %v2651 = vpop.f32.mrb[0].mxu0
        %v2652 = vadd.f32 0.0, %v2651
        %v2653 = vpop.f32.mrb[0].mxu0
        %2654 = vmatprep.mubr.f32.mxu0 0.0
        %2655 = vmatmul.mubr.f32.gmra.mrb[0].mxu0 %v2558
        %v2656 = vpop.f32.mrb[0].mxu0
        %v2657 = vadd.f32 0.0, %v2656
        %v2658 = vpop.f32.mrb[0].mxu0
        %2659 = vmatprep.mubr.f32.mxu0 0.0
        %2660 = vmatmul.mubr.f32.gmra.mrb[0].mxu0 %v2559
        %v2661 = vpop.f32.mrb[0].mxu0
        %v2662 = vadd.f32 0.0, %v2661
        %v2663 = vpop.f32.mrb[0].mxu0
        %2664 = vmatprep.mubr.f32.mxu0 0.0
        %2665 = vmatmul.mubr.f32.gmra.mrb[0].mxu0 %v2560
        %v2666 = vpop.f32.mrb[0].mxu0
        %v2667 = vadd.f32 0.0, %v2666
        %v2668 = vpop.f32.mrb[0].mxu0
        %2669 = vmatprep.mubr.f32.mxu0 0.0
        %2670 = vmatmul.mubr.f32.gmra.mrb[0].mxu0 %v2561
        %v2671 = vpop.f32.mrb[0].mxu0
        %v2672 = vadd.f32 0.0, %v2671
        %v2673 = vpop.f32.mrb[0].mxu0
        %2674 = vmatprep.mubr.f32.mxu0 0.0
        %2675 = vmatmul.mubr.f32.gmra.mrb[0].mxu0 %v2562
        %v2676 = vpop.f32.mrb[0].mxu0
        %v2677 = vadd.f32 0.0, %v2676
        %v2678 = vpop.f32.mrb[0].mxu0
        %2679 = vmatprep.mubr.f32.mxu0 0.0
        %2680 = vmatmul.mubr.f32.gmra.mrb[0].mxu0 %v2563
        %v2681 = vpop.f32.mrb[0].mxu0
        %v2682 = vadd.f32 0.0, %v2681
        %v2683 = vpop.f32.mrb[0].mxu0
        %2684 = vmatprep.mubr.f32.mxu0 0.0
        %2685 = vmatmul.mubr.f32.gmra.mrb[0].mxu0 %v2564
        %v2686 = vpop.f32.mrb[0].mxu0
        %v2687 = vadd.f32 0.0, %v2686
        %v2688 = vpop.f32.mrb[0].mxu0
        %2689 = vmatprep.mubr.f32.mxu0 0.0
        %2690 = vmatmul.mubr.f32.gmra.mrb[0].mxu0 %v2565
        %v2691 = vpop.f32.mrb[0].mxu0
        %v2692 = vadd.f32 0.0, %v2691
        %v2693 = vpop.f32.mrb[0].mxu0
        %2694 = vmatprep.mubr.f32.mxu0 0.0
        %2695 = vmatmul.mubr.f32.gmra.mrb[0].mxu0 %v2566
        %v2696 = vpop.f32.mrb[0].mxu0
        %v2697 = vadd.f32 0.0, %v2696
        %v2698 = vpop.f32.mrb[0].mxu0
        %2699 = vmatprep.mubr.f32.mxu0 0.0
        %2700 = vmatmul.mubr.f32.gmra.mrb[0].mxu0 %v2567
        %v2701 = vpop.f32.mrb[0].mxu0
        %v2702 = vadd.f32 0.0, %v2701
        %v2703 = vpop.f32.mrb[0].mxu0
        %2704 = vmatprep.mubr.f32.mxu0 0.0
        %2705 = vmatmul.mubr.f32.gmra.mrb[0].mxu0 %v2568
        %v2706 = vpop.f32.mrb[0].mxu0
        %v2707 = vadd.f32 0.0, %v2706
        %v2708 = vpop.f32.mrb[0].mxu0
        %2709 = vmatprep.mubr.f32.mxu0 0.0
        %2710 = vmatmul.mubr.f32.gmra.mrb[0].mxu0 %v2569
        %v2711 = vpop.f32.mrb[0].mxu0
        %v2712 = vadd.f32 0.0, %v2711
        %v2713 = vpop.f32.mrb[0].mxu0
        %2714 = vdwg.mxu0
        %2715 = vmatprep.subr.mxu0 0.0
        %2716 = vmatpush1.msra.mxu0 %v2637
        %2717 = vmatprep.subr.mxu0 0.0
        %2718 = vmatpush1.msra.mxu0 %v2642
        %2719 = vmatprep.subr.mxu0 0.0
        %2720 = vmatpush1.msra.mxu0 %v2647
        %2721 = vmatprep.subr.mxu0 0.0
        %2722 = vmatpush1.msra.mxu0 %v2652
        %2723 = vmatprep.subr.mxu0 0.0
        %2724 = vmatpush1.msra.mxu0 %v2657
        %2725 = vmatprep.subr.mxu0 0.0
        %2726 = vmatpush1.msra.mxu0 %v2662
        %2727 = vmatprep.subr.mxu0 0.0
        %2728 = vmatpush1.msra.mxu0 %v2667
        %2729 = vmatprep.subr.mxu0 0.0
        %2730 = vmatpush1.msra.mxu0 %v2672
        %2731 = vmatprep.subr.mxu0 0.0
        %2732 = vmatpush1.msra.mxu0 %v2677
        %2733 = vmatprep.subr.mxu0 0.0
        %2734 = vmatpush1.msra.mxu0 %v2682
        %2735 = vmatprep.subr.mxu0 0.0
        %2736 = vmatpush1.msra.mxu0 %v2687
        %2737 = vmatprep.subr.mxu0 0.0
        %2738 = vmatpush1.msra.mxu0 %v2692
        %2739 = vmatprep.subr.mxu0 0.0
        %2740 = vmatpush1.msra.mxu0 %v2697
        %2741 = vmatprep.subr.mxu0 0.0
        %2742 = vmatpush1.msra.mxu0 %v2702
        %2743 = vmatprep.subr.mxu0 0.0
        %2744 = vmatpush1.msra.mxu0 %v2707
        %2745 = vmatprep.subr.mxu0 0.0
        %2746 = vmatpush1.msra.mxu0 %v2712
        %2747 = vmatprep.subr.mxu0 0.0
        %2748 = vmatpush1.msra.mxu0 0.0
        %2749 = vmatprep.subr.mxu0 0.0
        %2750 = vmatpush1.msra.mxu0 0.0
        %2751 = vmatprep.subr.mxu0 0.0
        %2752 = vmatpush1.msra.mxu0 0.0
        %2753 = vmatprep.subr.mxu0 0.0
        %2754 = vmatpush1.msra.mxu0 0.0
        %2755 = vmatprep.subr.mxu0 0.0
        %2756 = vmatpush1.msra.mxu0 0.0
        %2757 = vmatprep.subr.mxu0 0.0
        %2758 = vmatpush1.msra.mxu0 0.0
        %2759 = vmatprep.subr.mxu0 0.0
        %2760 = vmatpush1.msra.mxu0 0.0
        %2761 = vmatprep.subr.mxu0 0.0
        %2762 = vmatpush1.msra.mxu0 0.0
        %2763 = vmatprep.subr.mxu0 0.0
        %2764 = vmatpush1.msra.mxu0 0.0
        %2765 = vmatprep.subr.mxu0 0.0
        %2766 = vmatpush1.msra.mxu0 0.0
        %2767 = vmatprep.subr.mxu0 0.0
        %2768 = vmatpush1.msra.mxu0 0.0
        %2769 = vmatprep.subr.mxu0 0.0
        %2770 = vmatpush1.msra.mxu0 0.0
        %2771 = vmatprep.subr.mxu0 0.0
        %2772 = vmatpush1.msra.mxu0 0.0
        %2773 = vmatprep.subr.mxu0 0.0
        %2774 = vmatpush1.msra.mxu0 0.0
        %2775 = vmatprep.subr.mxu0 0.0
        %2776 = vmatpush1.msra.mxu0 0.0
        %2777 = vmatprep.subr.mxu0 0.0
        %2778 = vmatpush1.msra.mxu0 0.0
        %2779 = vmatprep.mubr.f32.mxu0 0.0
        %2780 = vmatmul.mubr.f32.gmra.mrb[0].mxu0 %v296
        %v2781 = vpop.f32.mrb[0].mxu0
        %v2782 = vadd.f32 %v1538, %v2781
        %v2783 = vpop.f32.mrb[0].mxu0
        %2784 = vdwg.mxu0
        %v2787 = vunpack.c.l.s4 1966171168
        %v2788 = vunpack.c.0.s8 %v2787
        %v2789 = vlaneseq
        %v2790 = vshrl.u32 %v2789, 7
        %v2791 = vsub.s32 %v2788, %v2790
        %v2792 = vrot.slane %v2782, %v2791
        %v2793 = vcombine.high %v2792, %v2792
        %v2795 = vunpack.c.l.s4 1966171168
        %v2796 = vunpack.c.0.s8 %v2795
        %v2797 = vlaneseq
        %v2798 = vshrl.u32 %v2797, 7
        %v2799 = vsub.s32 %v2796, %v2798
        %v2800 = vrot.slane %v2792, %v2799
        %v2802 = vunpack.c.l.s4 1966171168
        %v2803 = vunpack.c.0.s8 %v2802
        %v2804 = vlaneseq
        %v2805 = vshrl.u32 %v2804, 7
        %v2806 = vsub.s32 %v2803, %v2805
        %v2807 = vrot.slane %v2793, %v2806
        %v2808 = vcombine.high %v2800, %v2800
        %v2809 = vcombine.high %v2807, %v2807
        %2814 = vst.msk [vmem:[%s239 + $0x1] sm:$0x1] %vm1639, %v2800
        %2815 = vst.msk [vmem:[%s239 + $0x3] sm:$0x1] %vm1639, %v2807
        %2816 = vst.msk [vmem:[%s239 + $0x5] sm:$0x1] %vm1639, %v2808
        %2817 = vst.msk [vmem:[%s239 + $0x7] sm:$0x1] %vm1639, %v2809
        %s2818 = sand.u32 %s153, 1
        %s2819 = scalar_lea.sflag [#allocation3], %s2818
        %s2820 = sand.u32 %s153, 1
        %s2821 = smul.addr %s2820, 8
        %s2822 = scalar_lea.vmem [#allocation2], %s2821
        // Predicated region
        $region41: #{tpu_custom_call.1} parent=39 // pred_check
          %p2823 = pneg %p163
        $region42: #{tpu_custom_call.1} parent=39 // pred_check_branch
          %2825 = sbr.rel (%p2823) target = $region44
        $region43: #{tpu_custom_call.1} parent=39 // pred_region
          %s2827 = ssub.s32 128, 128
          %2828 = vsyncadd %s2819, %s2827
          %s2829 = smul.addr %s23, 4
          %s2830 = sadd.s32 %s24, %s2829
          %s2831 = smul.addr %s2830, 32
          %s2832 = scalar_lea.hbm %s5, %s2831
          %s2833 = sshll.u32 %s2822, 4
          %s2834 = int_to_ptr.vmem [resolvable:$true] %s2833
          %2839 = dma.vmem_to_hbm [thread:$0]  %s2834, 128, %s2832, %s2819, 32, 32, 2
        $region44: #{tpu_custom_call.1} parent=39 // pred_fallthru
          _
      $region40: #{tpu_custom_call.1} parent=5 // pred_fallthru
        _
      %p2840 = scmp.le.s32.totalorder 2, %s14
      // Predicated region
      $region45: #{tpu_custom_call.1} parent=5 // pred_check
        %p2841 = pneg %p2840
      $region46: #{tpu_custom_call.1} parent=5 // pred_check_branch
        %2843 = sbr.rel (%p2841) target = $region48
      $region47: #{tpu_custom_call.1} parent=5 // pred_region
        %s2844 = ssub.s32 %s14, 2
        // Predicated region
        $region49: #{tpu_custom_call.1} parent=47 // pred_check
          %p2845 = pneg %p169
        $region50: #{tpu_custom_call.1} parent=47 // pred_check_branch
          %2847 = sbr.rel (%p2845) target = $region52
        $region51: #{tpu_custom_call.1} parent=47 // pred_region
          %s2848 = sand.u32 %s154, 1
          %s2849 = scalar_lea.sflag [#allocation3], %s2848
          %s2850 = sand.u32 %s154, 1
          %s2851 = smul.addr %s2850, 8
          %s2852 = scalar_lea.vmem [#allocation2], %s2851
          %2853 = dma.done %s2849, 128
        $region52: #{tpu_custom_call.1} parent=47 // pred_fallthru
          _
      $region48: #{tpu_custom_call.1} parent=5 // pred_fallthru
        _
    $region6: #{tpu_custom_call.1} parent=1 // loop_footer
      %s18 = sadd.s32 1, %s14
    $region7: #{tpu_custom_call.1} parent=1 // loop_footer_branch
      %13 = sbr.rel target = $region3
    $region8: #{tpu_custom_call.1} parent=1 // loop_exit
      _
    %2854 = vsyncpa [#allocation3], 1
    %s2855 = scalar_lea.sflag [#allocation3], 1
    %2856 = vsyncpa %s2855, 1

</llo_original>
